<compile_context>
chip_gen: v7x
topology: tpu7x:2x2x1
jax: 0.10.0
libtpu: 0.0.40
codegen_flags: <defaults>
</compile_context>

<pallas_src>
import functools

import jax
import jax.numpy as jnp
from jax.experimental import pallas as pl
from jax.experimental.pallas import tpu as pltpu

KH = KW = 3   # conv kernel size
R = 2         # pixel-shuffle upscale factor

_VMEM_BUDGET = 20 * 1024 * 1024     # sizing target (fits v5e/v6e/v7x comfortably)
_VMEM_LIMIT = 48 * 1024 * 1024      # explicit scoped-VMEM limit (< v7x 64 MiB)
_MIN_STEPS = 4                      # prefer >= 4 grid steps (2 TCs x pipelining)
_MIN_OUT_BLOCK = 256 * 1024         # ...but never shrink a step below this


def _round_up(x, m):
    return ((x + m - 1) // m) * m


def _conv_relu_kernel(w_ref, b_ref, s_ref, o_ref, *, wp):
    # w_ref: (9, Cout4, Cin)   conv weights, tap-major (ky*3 + kx)
    # b_ref: (Cout4, 1)        conv bias
    # s_ref: (Cin, slab_cols)  padded, flattened row-slab of one image (with halo)
    # o_ref: (Cout4, out_cols) conv output columns for this slab (ReLU fused)
    out_cols = o_ref.shape[-1]
    slab = s_ref[...]
    acc = jnp.zeros(o_ref.shape, jnp.float32)
    for ky in range(KH):
        for kx in range(KW):
            t = ky * KW + kx
            d = ky * wp + kx                       # fixed column offset of this tap
            tap = slab[:, d:d + out_cols]          # (Cin, out_cols) lane-shifted view
            acc = acc + jnp.dot(w_ref[t], tap, preferred_element_type=jnp.float32)
    acc = acc + b_ref[...]                         # broadcast bias over lanes
    o_ref[...] = jnp.maximum(acc, 0.0).astype(o_ref.dtype)


def _pick_rows(n, h, wp, cin, cout4):
    """Conv-output rows per grid step: as large as the VMEM budget allows,
    preferring >= _MIN_STEPS total steps when each step still moves a big block."""
    def vmem_est(ht):
        slab = cin * ((ht + 2) * wp + 2) * 4
        outb = cout4 * ht * wp * 4
        # double-buffered in/out + f32 accumulator + shifted-tap temporaries
        return 2 * slab + 2 * outb + 2 * outb + 4 * slab

    cands = [h] + list(range(_round_up(h, 8), 0, -8))
    best = None
    for ht in cands:
        if ht != h and ht % 8 != 0:      # HB > 1 requires ht to be a multiple of 8
            continue
        if vmem_est(ht) > _VMEM_BUDGET:
            continue
        if best is None:
            best = ht                    # largest block that fits the budget
        steps = n * (-(-h // ht))
        if steps >= _MIN_STEPS and cout4 * ht * wp * 4 >= _MIN_OUT_BLOCK:
            return ht
    return best if best is not None else 8


def subpixel_upsample(x_nchw, weight_oihw, bias, *, out_channels):
    """Equivalent of SubpixelUpsample.forward.

    x_nchw:      (N, Cin, H, W)               float32
    weight_oihw: (out_channels*4, Cin, 3, 3)  float32  (PyTorch OIHW layout)
    bias:        (out_channels*4,)            float32
    returns:     (N, out_channels, 2H, 2W)
    """
    N, Cin, H, W = x_nchw.shape
    Cout4 = weight_oihw.shape[0]
    assert Cout4 == out_channels * R * R

    # Lane-dense padded width (>= W+2, multiple of 16 so ht*Wp is a multiple of
    # 128 whenever ht is a multiple of 8) and rows-per-block.
    Wp = _round_up(W + 2, 16)
    ht = _pick_rows(N, H, Wp, Cin, Cout4)
    HB = int(pl.cdiv(H, ht))
    Hpad = HB * ht + 2
    slab_cols = (ht + 2) * Wp + 2
    out_cols = ht * Wp

    # --- input glue (cheap, ~1.2x of x): zero-pad for the "same" conv, flatten
    # the spatial dims, and cut into HB contiguous row-slabs (2-row halo each).
    xq = jnp.pad(x_nchw, ((0, 0), (0, 0), (1, Hpad - H - 1), (1, Wp - W - 1)))
    xf = xq.reshape(N, Cin, Hpad * Wp)
    xf = jnp.pad(xf, ((0, 0), (0, 0), (0, 2)))
    slabs = jnp.stack(
        [jax.lax.slice_in_dim(xf, hb * ht * Wp, hb * ht * Wp + slab_cols, axis=2)
         for hb in range(HB)], axis=1)                     # (N, HB, Cin, slab_cols)

    # Weights tap-major: w9[ky*3+kx, o, c] = weight[o, c, ky, kx]
    w9 = jnp.transpose(weight_oihw, (2, 3, 0, 1)).reshape(KH * KW, Cout4, Cin)
    b2 = bias.reshape(Cout4, 1)

    conv_flat = pl.pallas_call(
        functools.partial(_conv_relu_kernel, wp=Wp),
        out_shape=jax.ShapeDtypeStruct((N, Cout4, HB * out_cols), x_nchw.dtype),
        grid=(N, HB),
        in_specs=[
            pl.BlockSpec((KH * KW, Cout4, Cin), lambda n, hb: (0, 0, 0)),  # weights
            pl.BlockSpec((Cout4, 1), lambda n, hb: (0, 0)),                # bias
            pl.BlockSpec((None, None, Cin, slab_cols),
                         lambda n, hb: (n, hb, 0, 0)),                     # row slab
        ],
        out_specs=pl.BlockSpec((None, Cout4, out_cols), lambda n, hb: (n, 0, hb)),
        compiler_params=pltpu.CompilerParams(
            dimension_semantics=("parallel", "parallel"),
            vmem_limit_bytes=_VMEM_LIMIT),
    )(w9, b2, slabs)                                       # (N, Cout4, HB*ht*Wp)

    # --- PixelShuffle(2) glue: one fused slice + transpose.
    # TODO(synk): interleaving the 2x2 phases along lanes inside the kernel would
    # save this remaining HBM round trip of the 4x-expanded conv output.
    conv = conv_flat.reshape(N, Cout4, HB * ht, Wp)[:, :, :H, :W]
    y = conv.reshape(N, out_channels, R, R, H, W)          # (n, co, i, j, h, w)
    y = jnp.transpose(y, (0, 1, 4, 2, 5, 3))               # (n, co, h, i, w, j)
    return y.reshape(N, out_channels, H * R, W * R)


def _reference(x_nchw, weight_oihw, bias, *, out_channels):
    """Pure-JAX reference matching PyTorch semantics (for validation)."""
    N, Cin, H, W = x_nchw.shape
    conv = jax.lax.conv_general_dilated(
        x_nchw, weight_oihw, window_strides=(1, 1), padding="SAME",
        dimension_numbers=("NCHW", "OIHW", "NCHW"))
    conv = conv + bias[None, :, None, None]
    y = conv.reshape(N, out_channels, R, R, H, W)
    y = jnp.transpose(y, (0, 1, 4, 2, 5, 3))
    y = y.reshape(N, out_channels, H * R, W * R)
    return jnp.maximum(y, 0.0)


if __name__ == "__main__":
    in_channels = 4
    out_channels = 4
    N, H, W = 2, 16, 16

    key = jax.random.PRNGKey(0)
    kx, kw, kb = jax.random.split(key, 3)

    x = jax.random.normal(kx, (N, in_channels, H, W), dtype=jnp.float32)
    # PyTorch conv weight shape: (out*4, in, 3, 3)
    weight = jax.random.normal(
        kw, (out_channels * 4, in_channels, KH, KW), dtype=jnp.float32) * 0.1
    bias = jax.random.normal(kb, (out_channels * 4,), dtype=jnp.float32) * 0.1

    fn = jax.jit(functools.partial(subpixel_upsample, out_channels=out_channels))
    out = jax.block_until_ready(fn(x, weight, bias))

    ref = _reference(x, weight, bias, out_channels=out_channels)
    assert out.shape == (N, out_channels, 2 * H, 2 * W), out.shape
    assert jnp.allclose(out, ref, atol=1e-4, rtol=1e-4), "mismatch vs reference"

    print("KERNEL_OK")
</pallas_src>

<mosaic_0001>
module attributes {stable_mosaic.version = 11 : i64} {
  func.func @_conv_relu_kernel(%arg0: i32, %arg1: i32, %arg2: memref<9x16x4xf32, #tpu.memory_space<vmem>>, %arg3: memref<16x1xf32, #tpu.memory_space<vmem>>, %arg4: memref<1x1x4x578xf32, #tpu.memory_space<vmem>>, %arg5: memref<1x16x512xf32, #tpu.memory_space<vmem>>) attributes {dimension_semantics = [#tpu.dimension_semantics<parallel>, #tpu.dimension_semantics<parallel>], iteration_bounds = array<i64: 2, 1>, scalar_prefetch = 0 : i64, scratch_operands = 0 : i64, tpu.core_type = #tpu.core_type<tc>, window_params = [{pipeline_mode = #tpu.pipeline_mode<synchronous>, transform_indices = @transform_0, window_bounds = array<i64: 9, 16, 4>}, {pipeline_mode = #tpu.pipeline_mode<synchronous>, transform_indices = @transform_1, window_bounds = array<i64: 16, 1>}, {transform_indices = @transform_2, window_bounds = array<i64: 1, 1, 4, 578>}, {transform_indices = @transform_3, window_bounds = array<i64: 1, 16, 512>}]} {
    %c0 = arith.constant 0 : index
    %c0_0 = arith.constant 0 : index
    %c0_1 = arith.constant 0 : index
    %c0_2 = arith.constant 0 : index
    %0 = vector.load %arg4[%c0, %c0_0, %c0_1, %c0_2] : memref<1x1x4x578xf32, #tpu.memory_space<vmem>>, vector<1x1x4x578xf32>
    %1 = vector.shape_cast %0 : vector<1x1x4x578xf32> to vector<4x578xf32>
    %cst = arith.constant 0.000000e+00 : f32
    %2 = vector.broadcast %cst : f32 to vector<16x512xf32>
    %3 = vector.extract_strided_slice %1 {offsets = [0, 0], sizes = [4, 512], strides = [1, 1]} : vector<4x578xf32> to vector<4x512xf32>
    %c0_3 = arith.constant 0 : index
    %c0_4 = arith.constant 0 : index
    %c0_5 = arith.constant 0 : index
    %4 = vector.load %arg2[%c0_3, %c0_4, %c0_5] : memref<9x16x4xf32, #tpu.memory_space<vmem>>, vector<1x16x4xf32>
    %5 = vector.shape_cast %4 : vector<1x16x4xf32> to vector<16x4xf32>
    %cst_6 = arith.constant dense<0.000000e+00> : vector<16x512xf32>
    %6 = tpu.matmul %5, %3, %cst_6 {dimension_numbers = #tpu.dot_dimension_numbers<[1], [0], [0], [1], [0, 0, 1, 1], [], []>} : vector<16x4xf32>, vector<4x512xf32>, vector<16x512xf32> -> vector<16x512xf32>
    %7 = arith.addf %2, %6 : vector<16x512xf32>
    %8 = vector.extract_strided_slice %1 {offsets = [0, 1], sizes = [4, 512], strides = [1, 1]} : vector<4x578xf32> to vector<4x512xf32>
    %c1 = arith.constant 1 : index
    %c0_7 = arith.constant 0 : index
    %c0_8 = arith.constant 0 : index
    %9 = vector.load %arg2[%c1, %c0_7, %c0_8] : memref<9x16x4xf32, #tpu.memory_space<vmem>>, vector<1x16x4xf32>
    %10 = vector.shape_cast %9 : vector<1x16x4xf32> to vector<16x4xf32>
    %cst_9 = arith.constant dense<0.000000e+00> : vector<16x512xf32>
    %11 = tpu.matmul %10, %8, %cst_9 {dimension_numbers = #tpu.dot_dimension_numbers<[1], [0], [0], [1], [0, 0, 1, 1], [], []>} : vector<16x4xf32>, vector<4x512xf32>, vector<16x512xf32> -> vector<16x512xf32>
    %12 = arith.addf %7, %11 : vector<16x512xf32>
    %13 = vector.extract_strided_slice %1 {offsets = [0, 2], sizes = [4, 512], strides = [1, 1]} : vector<4x578xf32> to vector<4x512xf32>
    %c2 = arith.constant 2 : index
    %c0_10 = arith.constant 0 : index
    %c0_11 = arith.constant 0 : index
    %14 = vector.load %arg2[%c2, %c0_10, %c0_11] : memref<9x16x4xf32, #tpu.memory_space<vmem>>, vector<1x16x4xf32>
    %15 = vector.shape_cast %14 : vector<1x16x4xf32> to vector<16x4xf32>
    %cst_12 = arith.constant dense<0.000000e+00> : vector<16x512xf32>
    %16 = tpu.matmul %15, %13, %cst_12 {dimension_numbers = #tpu.dot_dimension_numbers<[1], [0], [0], [1], [0, 0, 1, 1], [], []>} : vector<16x4xf32>, vector<4x512xf32>, vector<16x512xf32> -> vector<16x512xf32>
    %17 = arith.addf %12, %16 : vector<16x512xf32>
    %18 = vector.extract_strided_slice %1 {offsets = [0, 32], sizes = [4, 512], strides = [1, 1]} : vector<4x578xf32> to vector<4x512xf32>
    %c3 = arith.constant 3 : index
    %c0_13 = arith.constant 0 : index
    %c0_14 = arith.constant 0 : index
    %19 = vector.load %arg2[%c3, %c0_13, %c0_14] : memref<9x16x4xf32, #tpu.memory_space<vmem>>, vector<1x16x4xf32>
    %20 = vector.shape_cast %19 : vector<1x16x4xf32> to vector<16x4xf32>
    %cst_15 = arith.constant dense<0.000000e+00> : vector<16x512xf32>
    %21 = tpu.matmul %20, %18, %cst_15 {dimension_numbers = #tpu.dot_dimension_numbers<[1], [0], [0], [1], [0, 0, 1, 1], [], []>} : vector<16x4xf32>, vector<4x512xf32>, vector<16x512xf32> -> vector<16x512xf32>
    %22 = arith.addf %17, %21 : vector<16x512xf32>
    %23 = vector.extract_strided_slice %1 {offsets = [0, 33], sizes = [4, 512], strides = [1, 1]} : vector<4x578xf32> to vector<4x512xf32>
    %c4 = arith.constant 4 : index
    %c0_16 = arith.constant 0 : index
    %c0_17 = arith.constant 0 : index
    %24 = vector.load %arg2[%c4, %c0_16, %c0_17] : memref<9x16x4xf32, #tpu.memory_space<vmem>>, vector<1x16x4xf32>
    %25 = vector.shape_cast %24 : vector<1x16x4xf32> to vector<16x4xf32>
    %cst_18 = arith.constant dense<0.000000e+00> : vector<16x512xf32>
    %26 = tpu.matmul %25, %23, %cst_18 {dimension_numbers = #tpu.dot_dimension_numbers<[1], [0], [0], [1], [0, 0, 1, 1], [], []>} : vector<16x4xf32>, vector<4x512xf32>, vector<16x512xf32> -> vector<16x512xf32>
    %27 = arith.addf %22, %26 : vector<16x512xf32>
    %28 = vector.extract_strided_slice %1 {offsets = [0, 34], sizes = [4, 512], strides = [1, 1]} : vector<4x578xf32> to vector<4x512xf32>
    %c5 = arith.constant 5 : index
    %c0_19 = arith.constant 0 : index
    %c0_20 = arith.constant 0 : index
    %29 = vector.load %arg2[%c5, %c0_19, %c0_20] : memref<9x16x4xf32, #tpu.memory_space<vmem>>, vector<1x16x4xf32>
    %30 = vector.shape_cast %29 : vector<1x16x4xf32> to vector<16x4xf32>
    %cst_21 = arith.constant dense<0.000000e+00> : vector<16x512xf32>
    %31 = tpu.matmul %30, %28, %cst_21 {dimension_numbers = #tpu.dot_dimension_numbers<[1], [0], [0], [1], [0, 0, 1, 1], [], []>} : vector<16x4xf32>, vector<4x512xf32>, vector<16x512xf32> -> vector<16x512xf32>
    %32 = arith.addf %27, %31 : vector<16x512xf32>
    %33 = vector.extract_strided_slice %1 {offsets = [0, 64], sizes = [4, 512], strides = [1, 1]} : vector<4x578xf32> to vector<4x512xf32>
    %c6 = arith.constant 6 : index
    %c0_22 = arith.constant 0 : index
    %c0_23 = arith.constant 0 : index
    %34 = vector.load %arg2[%c6, %c0_22, %c0_23] : memref<9x16x4xf32, #tpu.memory_space<vmem>>, vector<1x16x4xf32>
    %35 = vector.shape_cast %34 : vector<1x16x4xf32> to vector<16x4xf32>
    %cst_24 = arith.constant dense<0.000000e+00> : vector<16x512xf32>
    %36 = tpu.matmul %35, %33, %cst_24 {dimension_numbers = #tpu.dot_dimension_numbers<[1], [0], [0], [1], [0, 0, 1, 1], [], []>} : vector<16x4xf32>, vector<4x512xf32>, vector<16x512xf32> -> vector<16x512xf32>
    %37 = arith.addf %32, %36 : vector<16x512xf32>
    %38 = vector.extract_strided_slice %1 {offsets = [0, 65], sizes = [4, 512], strides = [1, 1]} : vector<4x578xf32> to vector<4x512xf32>
    %c7 = arith.constant 7 : index
    %c0_25 = arith.constant 0 : index
    %c0_26 = arith.constant 0 : index
    %39 = vector.load %arg2[%c7, %c0_25, %c0_26] : memref<9x16x4xf32, #tpu.memory_space<vmem>>, vector<1x16x4xf32>
    %40 = vector.shape_cast %39 : vector<1x16x4xf32> to vector<16x4xf32>
    %cst_27 = arith.constant dense<0.000000e+00> : vector<16x512xf32>
    %41 = tpu.matmul %40, %38, %cst_27 {dimension_numbers = #tpu.dot_dimension_numbers<[1], [0], [0], [1], [0, 0, 1, 1], [], []>} : vector<16x4xf32>, vector<4x512xf32>, vector<16x512xf32> -> vector<16x512xf32>
    %42 = arith.addf %37, %41 : vector<16x512xf32>
    %43 = vector.extract_strided_slice %1 {offsets = [0, 66], sizes = [4, 512], strides = [1, 1]} : vector<4x578xf32> to vector<4x512xf32>
    %c8 = arith.constant 8 : index
    %c0_28 = arith.constant 0 : index
    %c0_29 = arith.constant 0 : index
    %44 = vector.load %arg2[%c8, %c0_28, %c0_29] : memref<9x16x4xf32, #tpu.memory_space<vmem>>, vector<1x16x4xf32>
    %45 = vector.shape_cast %44 : vector<1x16x4xf32> to vector<16x4xf32>
    %cst_30 = arith.constant dense<0.000000e+00> : vector<16x512xf32>
    %46 = tpu.matmul %45, %43, %cst_30 {dimension_numbers = #tpu.dot_dimension_numbers<[1], [0], [0], [1], [0, 0, 1, 1], [], []>} : vector<16x4xf32>, vector<4x512xf32>, vector<16x512xf32> -> vector<16x512xf32>
    %47 = arith.addf %42, %46 : vector<16x512xf32>
    %c0_31 = arith.constant 0 : index
    %c0_32 = arith.constant 0 : index
    %48 = vector.load %arg3[%c0_31, %c0_32] : memref<16x1xf32, #tpu.memory_space<vmem>>, vector<16x1xf32>
    %49 = vector.broadcast %48 : vector<16x1xf32> to vector<16x512xf32>
    %50 = arith.addf %47, %49 : vector<16x512xf32>
    %cst_33 = arith.constant 0.000000e+00 : f32
    %51 = vector.broadcast %cst_33 : f32 to vector<16x512xf32>
    %52 = arith.maximumf %50, %51 : vector<16x512xf32>
    %c0_34 = arith.constant 0 : index
    %c0_35 = arith.constant 0 : index
    %c0_36 = arith.constant 0 : index
    %53 = vector.load %arg5[%c0_34, %c0_35, %c0_36] : memref<1x16x512xf32, #tpu.memory_space<vmem>>, vector<1x16x512xf32>
    %54 = vector.shape_cast %53 : vector<1x16x512xf32> to vector<16x512xf32>
    %55 = vector.shape_cast %52 : vector<16x512xf32> to vector<1x16x512xf32>
    tpu.vector_store %arg5[%c0_34, %c0_35, %c0_36], %55 {strides = array<i32>} : memref<1x16x512xf32, #tpu.memory_space<vmem>>, vector<1x16x512xf32>,
    return
  }
  func.func @transform_0(%arg0: i32, %arg1: i32) -> (i32, i32, i32) {
    %c0_i32 = arith.constant 0 : i32
    %c0_i32_0 = arith.constant 0 : i32
    %c0_i32_1 = arith.constant 0 : i32
    %c0_i32_2 = arith.constant 0 : i32
    return %c0_i32, %c0_i32_0, %c0_i32_1 : i32, i32, i32
  }
  func.func @transform_1(%arg0: i32, %arg1: i32) -> (i32, i32) {
    %c0_i32 = arith.constant 0 : i32
    %c0_i32_0 = arith.constant 0 : i32
    %c0_i32_1 = arith.constant 0 : i32
    return %c0_i32, %c0_i32_0 : i32, i32
  }
  func.func @transform_2(%arg0: i32, %arg1: i32) -> (i32, i32, i32, i32) {
    %c0_i32 = arith.constant 0 : i32
    %c0_i32_0 = arith.constant 0 : i32
    %c0_i32_1 = arith.constant 0 : i32
    return %arg0, %arg1, %c0_i32, %c0_i32_0 : i32, i32, i32, i32
  }
  func.func @transform_3(%arg0: i32, %arg1: i32) -> (i32, i32, i32) {
    %c0_i32 = arith.constant 0 : i32
    %c0_i32_0 = arith.constant 0 : i32
    return %arg0, %c0_i32, %arg1 : i32, i32, i32
  }
}

</mosaic_0001>

<llo_original>
// kernel: subpixel_upsample.1
$region0: #{subpixel_upsample.1}
  #allocation0 [shape = 'u32[]', space=smem, size = 0x4, offset = 0x4, fixed_abs, tag = 'smem constant byte address 0x4 - core index']
  #allocation1 [shape = 'u32[144,128]{1,0:T(1,128)}', space=vmem, size = 0x12000, scoped, tag = 'internal scratch']
  %s0 = inlined_call_operand.vmem [shape: f32[9,16,4], index: 0, kind: input, shape index: {}]
  %s1 = inlined_call_operand.vmem [shape: f32[16,1], index: 1, kind: input, shape index: {}]
  %s2 = inlined_call_operand.vmem [shape: f32[2,1,4,578], index: 2, kind: input, shape index: {}]
  %s3 = inlined_call_operand.vmem [shape: f32[2,16,512], index: 3, kind: output, shape index: {}]
  %s4 = sld [smem:[#allocation0]]
  $region45: #{subpixel_upsample.1} parent=0
    _
  %s6 = ssub.s32 1, %s4
  %s7 = scalar_select 0, %s6, %s4
  loop: start=0, step=1, limit=4
  $region2: #{subpixel_upsample.1} parent=0 // loop_pre_header
    _
  $region3: #{subpixel_upsample.1} parent=0 // loop_header
    %s9 = sphi 0, %s13
    %p10 = scmp.ge.s32.totalorder %s9, 4
    %s16 = sphi 0, %s28
    %s17 = sphi 0, %s24
    %s18 = sphi 0, %s16
    %s19 = sphi 0, %s17
    %s20 = sphi 0, %s18
    %s21 = sphi 0, %s19
    %s29 = sphi 0, %s29
    %s31 = sphi 0, %s29
    %s32 = sphi 0, %s31
    %s46 = sphi 0, %s32
    %s50 = sphi 0, %s50
    %s52 = sphi 0, %s50
    %s53 = sphi 0, %s52
    %s67 = sphi 0, %s53
    %s75 = sphi 0, %s77
    %s78 = sphi 0, %s75
    %s79 = sphi 0, %s78
    %s95 = sphi 0, %s79
    %s103 = sphi 0, %s105
    %s106 = sphi 0, %s103
    %s107 = sphi 0, %s106
    %s123 = sphi 0, %s107
  $region4: #{subpixel_upsample.1} parent=0 // loop_header_branch
    %12 = sbr.rel (%p10) target = $region8
  $region5: #{subpixel_upsample.1} parent=0 // loop_body
    %s14 = ssub.s32 %s9, 1
    %s15 = ssub.s32 %s9, 2
    %s22 = sadd.s32 1, %s17
    %p23 = scmp.ge.s32.totalorder %s22, 1
    %s24 = scalar_select %p23, 0, %s22
    %s25 = sadd.s32 1, %s16
    %s26 = scalar_select %p23, %s25, %s16
    %p27 = scmp.ge.s32.totalorder %s26, 2
    %s28 = scalar_select %p27, 0, %s26
    %s30 = sadd.s32 %s29, 1
    %p33 = scmp.eq.s32.totalorder %s9, 1
    %p34 = scmp.ne.s32.totalorder %s29, %s31
    %p35 = scmp.eq.s32.totalorder %s9, 0
    %p36 = por %p34, %p35
    %p37 = scmp.ne.s32.totalorder %s29, %s31
    %p38 = scmp.eq.s32.totalorder %s14, 1
    %p39 = por %p37, %p38
    %p40 = scmp.ne.s32.totalorder %s31, %s32
    %p41 = scmp.eq.s32.totalorder %s14, 0
    %p42 = por %p40, %p41
    %p43 = scmp.ne.s32.totalorder %s31, %s32
    %p44 = scmp.eq.s32.totalorder %s15, 1
    %p45 = por %p43, %p44
    %p47 = scmp.ne.s32.totalorder %s32, %s46
    %p48 = scmp.eq.s32.totalorder %s15, 0
    %p49 = por %p47, %p48
    %s51 = sadd.s32 %s50, 1
    %p54 = scmp.eq.s32.totalorder %s9, 1
    %p55 = scmp.ne.s32.totalorder %s50, %s52
    %p56 = scmp.eq.s32.totalorder %s9, 0
    %p57 = por %p55, %p56
    %p58 = scmp.ne.s32.totalorder %s50, %s52
    %p59 = scmp.eq.s32.totalorder %s14, 1
    %p60 = por %p58, %p59
    %p61 = scmp.ne.s32.totalorder %s52, %s53
    %p62 = scmp.eq.s32.totalorder %s14, 0
    %p63 = por %p61, %p62
    %p64 = scmp.ne.s32.totalorder %s52, %s53
    %p65 = scmp.eq.s32.totalorder %s15, 1
    %p66 = por %p64, %p65
    %p68 = scmp.ne.s32.totalorder %s53, %s67
    %p69 = scmp.eq.s32.totalorder %s15, 0
    %p70 = por %p68, %p69
    %s71 = ssub.s32 %s16, %s28
    %s72 = ssub.s32 %s17, %s24
    %s73 = sor.u32 %s71, %s72
    %p74 = scmp.eq.s32.totalorder %s73, 0
    %s76 = sadd.s32 %s75, 1
    %s77 = scalar_select %p74, %s75, %s76
    %p80 = pneg %p74
    %p81 = scmp.eq.s32.totalorder %s9, 1
    %p82 = por %p80, %p81
    %p83 = scmp.ne.s32.totalorder %s75, %s78
    %p84 = scmp.eq.s32.totalorder %s9, 0
    %p85 = por %p83, %p84
    %p86 = scmp.ne.s32.totalorder %s75, %s78
    %p87 = scmp.eq.s32.totalorder %s14, 1
    %p88 = por %p86, %p87
    %p89 = scmp.ne.s32.totalorder %s78, %s79
    %p90 = scmp.eq.s32.totalorder %s14, 0
    %p91 = por %p89, %p90
    %p92 = scmp.ne.s32.totalorder %s78, %s79
    %p93 = scmp.eq.s32.totalorder %s15, 1
    %p94 = por %p92, %p93
    %p96 = scmp.ne.s32.totalorder %s79, %s95
    %p97 = scmp.eq.s32.totalorder %s15, 0
    %p98 = por %p96, %p97
    %s99 = ssub.s32 %s16, %s28
    %s100 = ssub.s32 %s17, %s24
    %s101 = sor.u32 %s99, %s100
    %p102 = scmp.eq.s32.totalorder %s101, 0
    %s104 = sadd.s32 %s103, 1
    %s105 = scalar_select %p102, %s103, %s104
    %p108 = pneg %p102
    %p109 = scmp.eq.s32.totalorder %s9, 1
    %p110 = por %p108, %p109
    %p111 = scmp.ne.s32.totalorder %s103, %s106
    %p112 = scmp.eq.s32.totalorder %s9, 0
    %p113 = por %p111, %p112
    %p114 = scmp.ne.s32.totalorder %s103, %s106
    %p115 = scmp.eq.s32.totalorder %s14, 1
    %p116 = por %p114, %p115
    %p117 = scmp.ne.s32.totalorder %s106, %s107
    %p118 = scmp.eq.s32.totalorder %s14, 0
    %p119 = por %p117, %p118
    %p120 = scmp.ne.s32.totalorder %s106, %s107
    %p121 = scmp.eq.s32.totalorder %s15, 1
    %p122 = por %p120, %p121
    %p124 = scmp.ne.s32.totalorder %s107, %s123
    %p125 = scmp.eq.s32.totalorder %s15, 0
    %p126 = por %p124, %p125
    %p127 = scmp.le.s32.totalorder 1, %s9
    %p128 = scmp.lt.s32.totalorder %s9, 3
    %p129 = pnand %p127, %p128
    %p130 = pneg %p129
    // Predicated region
    $region9: #{subpixel_upsample.1} parent=5 // pred_check
      _
    $region10: #{subpixel_upsample.1} parent=5 // pred_check_branch
      %132 = sbr.rel (%p129) target = $region12
    $region11: #{subpixel_upsample.1} parent=5 // pred_region
      %s133 = ssub.s32 %s9, 1
      // Predicated region
      $region13: #{subpixel_upsample.1} parent=11 // pred_check
        %p134 = pneg %p42
      $region14: #{subpixel_upsample.1} parent=11 // pred_check_branch
        %136 = sbr.rel (%p134) target = $region16
      $region15: #{subpixel_upsample.1} parent=11 // pred_region
        _
      $region16: #{subpixel_upsample.1} parent=11 // pred_fallthru
        _
      // Predicated region
      $region17: #{subpixel_upsample.1} parent=11 // pred_check
        %p137 = pneg %p63
      $region18: #{subpixel_upsample.1} parent=11 // pred_check_branch
        %139 = sbr.rel (%p137) target = $region20
      $region19: #{subpixel_upsample.1} parent=11 // pred_region
        _
      $region20: #{subpixel_upsample.1} parent=11 // pred_fallthru
        _
    $region12: #{subpixel_upsample.1} parent=5 // pred_fallthru
      _
    %p140 = scmp.lt.s32.totalorder %s9, 2
    // Predicated region
    $region21: #{subpixel_upsample.1} parent=5 // pred_check
      %p141 = pneg %p140
    $region22: #{subpixel_upsample.1} parent=5 // pred_check_branch
      %143 = sbr.rel (%p141) target = $region24
    $region23: #{subpixel_upsample.1} parent=5 // pred_region
      // Predicated region
      $region25: #{subpixel_upsample.1} parent=23 // pred_check
        %p144 = pneg %p85
      $region26: #{subpixel_upsample.1} parent=23 // pred_check_branch
        %146 = sbr.rel (%p144) target = $region28
      $region27: #{subpixel_upsample.1} parent=23 // pred_region
        %p147 = scmp.lt.s32.totalorder %s16, 1
        %s148 = scalar_select %p147, %s16, 1
        %p149 = scmp.lt.s32.totalorder %s17, 0
        %s150 = scalar_select %p149, %s17, 0
        %s151 = smul.addr %s150, 5
        %s152 = smul.addr %s148, 5
        %s153 = sadd.s32 %s151, %s152
        %s154 = smul.addr %s153, 4
        %s155 = scalar_lea.vmem %s2, %s154
      $region28: #{subpixel_upsample.1} parent=23 // pred_fallthru
        _
    $region24: #{subpixel_upsample.1} parent=5 // pred_fallthru
      _
    %p156 = scmp.le.s32.totalorder 1, %s9
    %p157 = scmp.lt.s32.totalorder %s9, 3
    %p158 = pnand %p156, %p157
    %p159 = pneg %p158
    // Predicated region
    $region29: #{subpixel_upsample.1} parent=5 // pred_check
      _
    $region30: #{subpixel_upsample.1} parent=5 // pred_check_branch
      %161 = sbr.rel (%p158) target = $region32
    $region31: #{subpixel_upsample.1} parent=5 // pred_region
      %s162 = ssub.s32 %s9, 1
      %p163 = pneg %p42
      %p164 = pneg %p39
      %p165 = pneg %p63
      %p166 = pneg %p60
      %p167 = scmp.lt.s32.totalorder %s18, 1
      %s168 = scalar_select %p167, %s18, 1
      %p169 = scmp.lt.s32.totalorder %s19, 0
      %s170 = scalar_select %p169, %s19, 0
      %s171 = smul.addr %s170, 5
      %s172 = smul.addr %s168, 5
      %s173 = sadd.s32 %s171, %s172
      %s174 = smul.addr %s173, 4
      %s175 = scalar_lea.vmem %s2, %s174
      %p176 = pneg %p91
      %p177 = pneg %p88
      %p178 = pneg %p119
      %p179 = pneg %p116
      %s180 = smul.u32 4, %s19
      %p181 = scmp.lt.s32.totalorder %s18, 1
      %s182 = scalar_select %p181, %s18, 1
      %p183 = scmp.lt.s32.totalorder %s180, 3
      %s184 = scalar_select %p183, %s180, 3
      %s185 = smul.addr %s182, 8
      %s186 = sadd.s32 %s184, %s185
      %s187 = smul.addr %s186, 8
      %s188 = scalar_lea.vmem %s3, %s187
      %p189 = scmp.lt.s32.totalorder %s18, 1
      %s190 = scalar_select %p189, %s18, 1
      %p191 = scmp.lt.s32.totalorder %s19, 0
      %s192 = scalar_select %p191, %s19, 0
      %s193 = smul.addr %s192, 5
      %s194 = smul.addr %s190, 5
      %s195 = sadd.s32 %s193, %s194
      %s196 = smul.addr %s195, 4
      %s197 = scalar_lea.vmem %s2, %s196
      %s198 = smul.u32 4, %s19
      %p199 = scmp.lt.s32.totalorder %s18, 1
      %s200 = scalar_select %p199, %s18, 1
      %p201 = scmp.lt.s32.totalorder %s198, 3
      %s202 = scalar_select %p201, %s198, 3
      %s203 = smul.addr %s200, 8
      %s204 = sadd.s32 %s202, %s203
      %s205 = smul.addr %s204, 8
      %s206 = scalar_lea.vmem %s3, %s205
      %s207 = smul.u32 4, %s19
      %v208 = vld [vmem:[%s197] sm:$0xff]
      %v209 = vld [vmem:[%s197 + $0x8] sm:$0xff]
      %v210 = vld [vmem:[%s197 + $0x10] sm:$0xf]
      %v211 = vld [vmem:[%s0] sm:$0xff]
      %v212 = vld [vmem:[%s0 + $0x8] sm:$0xff]
      %s213 = scalar_lea.vmem %s0, 16
      %v214 = vld [vmem:[%s213] sm:$0xff]
      %v215 = vld [vmem:[%s213 + $0x8] sm:$0xff]
      %v219 = vcombine.high %v208, %v208
      %v220 = vcombine.high %v209, %v209
      %221 = vrot.lane.b32.xlu0 %v208, 127
      %v222 = vpop.permute.xlu0 %221
      %223 = vrot.lane.b32.xlu0 %v219, 127
      %v224 = vpop.permute.xlu0 %223
      %225 = vrot.lane.b32.xlu0 %v209, 127
      %v226 = vpop.permute.xlu0 %225
      %227 = vrot.lane.b32.xlu0 %v220, 127
      %v228 = vpop.permute.xlu0 %227
      %229 = vrot.lane.b32.xlu0 %v210, 127
      %v230 = vpop.permute.xlu0 %229
      %vm231 = vcmask 1039360
      %v232 = vsel %vm231, %v222, %v224
      %v233 = vsel %vm231, %v224, %v226
      %v234 = vsel %vm231, %v226, %v228
      %v235 = vsel %vm231, %v228, %v230
      %vm236 = vcmask 31744
      %v238 = vsel %vm236, %v214, 0
      %v241 = vsel %vm236, %v215, 0
      %vm243 = vcmask 1043456
      %v244 = vsel %vm243, %v232, 0
      %v246 = vsel %vm243, %v233, 0
      %v248 = vsel %vm243, %v234, 0
      %v250 = vsel %vm243, %v235, 0
      %252 = vmatprep.subr.mxu0 %v246
      %253 = vmatpush1.msra.mxu0 %v244
      %254 = vmatprep.subr.mxu0 0.0
      %255 = vmatpush1.msra.mxu0 0.0
      %256 = vmatprep.subr.mxu0 0.0
      %257 = vmatpush1.msra.mxu0 0.0
      %258 = vmatprep.subr.mxu0 0.0
      %259 = vmatpush1.msra.mxu0 0.0
      %260 = vmatprep.subr.mxu0 0.0
      %261 = vmatpush1.msra.mxu0 0.0
      %262 = vmatprep.subr.mxu0 0.0
      %263 = vmatpush1.msra.mxu0 0.0
      %264 = vmatprep.subr.mxu0 0.0
      %265 = vmatpush1.msra.mxu0 0.0
      %266 = vmatprep.subr.mxu0 0.0
      %267 = vmatpush1.msra.mxu0 0.0
      %268 = vmatprep.subr.mxu0 0.0
      %269 = vmatpush1.msra.mxu0 0.0
      %270 = vmatprep.subr.mxu0 0.0
      %271 = vmatpush1.msra.mxu0 0.0
      %272 = vmatprep.subr.mxu0 0.0
      %273 = vmatpush1.msra.mxu0 0.0
      %274 = vmatprep.subr.mxu0 0.0
      %275 = vmatpush1.msra.mxu0 0.0
      %276 = vmatprep.subr.mxu0 0.0
      %277 = vmatpush1.msra.mxu0 0.0
      %278 = vmatprep.subr.mxu0 0.0
      %279 = vmatpush1.msra.mxu0 0.0
      %280 = vmatprep.subr.mxu0 0.0
      %281 = vmatpush1.msra.mxu0 0.0
      %282 = vmatprep.subr.mxu0 0.0
      %283 = vmatpush1.msra.mxu0 0.0
      %284 = vmatprep.subr.mxu0 0.0
      %285 = vmatpush1.msra.mxu0 0.0
      %286 = vmatprep.subr.mxu0 0.0
      %287 = vmatpush1.msra.mxu0 0.0
      %288 = vmatprep.subr.mxu0 0.0
      %289 = vmatpush1.msra.mxu0 0.0
      %290 = vmatprep.subr.mxu0 0.0
      %291 = vmatpush1.msra.mxu0 0.0
      %292 = vmatprep.subr.mxu0 0.0
      %293 = vmatpush1.msra.mxu0 0.0
      %294 = vmatprep.subr.mxu0 0.0
      %295 = vmatpush1.msra.mxu0 0.0
      %296 = vmatprep.subr.mxu0 0.0
      %297 = vmatpush1.msra.mxu0 0.0
      %298 = vmatprep.subr.mxu0 0.0
      %299 = vmatpush1.msra.mxu0 0.0
      %300 = vmatprep.subr.mxu0 0.0
      %301 = vmatpush1.msra.mxu0 0.0
      %302 = vmatprep.subr.mxu0 0.0
      %303 = vmatpush1.msra.mxu0 0.0
      %304 = vmatprep.subr.mxu0 0.0
      %305 = vmatpush1.msra.mxu0 0.0
      %306 = vmatprep.subr.mxu0 0.0
      %307 = vmatpush1.msra.mxu0 0.0
      %308 = vmatprep.subr.mxu0 0.0
      %309 = vmatpush1.msra.mxu0 0.0
      %310 = vmatprep.subr.mxu0 0.0
      %311 = vmatpush1.msra.mxu0 0.0
      %312 = vmatprep.subr.mxu0 0.0
      %313 = vmatpush1.msra.mxu0 0.0
      %314 = vmatprep.subr.mxu0 0.0
      %315 = vmatpush1.msra.mxu0 0.0
      %316 = vmatprep.mubr.f32.mxu0 0.0
      %317 = vmatmul.mubr.f32.gmra.mrb[0].mxu0 %v238
      %v318 = vpop.f32.mrb[0].mxu0
      %v319 = vadd.f32 0.0, %v318
      %v320 = vpop.f32.mrb[0].mxu0
      %v321 = vadd.f32 0.0, %v320
      %322 = vmatprep.mubr.f32.mxu0 0.0
      %323 = vmatmul.mubr.f32.gmra.mrb[0].mxu0 %v241
      %v324 = vpop.f32.mrb[0].mxu0
      %v325 = vadd.f32 0.0, %v324
      %v326 = vpop.f32.mrb[0].mxu0
      %v327 = vadd.f32 0.0, %v326
      %328 = vdwg.mxu0
      %329 = vmatprep.subr.mxu0 %v250
      %330 = vmatpush1.msra.mxu0 %v248
      %331 = vmatprep.subr.mxu0 0.0
      %332 = vmatpush1.msra.mxu0 0.0
      %333 = vmatprep.subr.mxu0 0.0
      %334 = vmatpush1.msra.mxu0 0.0
      %335 = vmatprep.subr.mxu0 0.0
      %336 = vmatpush1.msra.mxu0 0.0
      %337 = vmatprep.subr.mxu0 0.0
      %338 = vmatpush1.msra.mxu0 0.0
      %339 = vmatprep.subr.mxu0 0.0
      %340 = vmatpush1.msra.mxu0 0.0
      %341 = vmatprep.subr.mxu0 0.0
      %342 = vmatpush1.msra.mxu0 0.0
      %343 = vmatprep.subr.mxu0 0.0
      %344 = vmatpush1.msra.mxu0 0.0
      %345 = vmatprep.subr.mxu0 0.0
      %346 = vmatpush1.msra.mxu0 0.0
      %347 = vmatprep.subr.mxu0 0.0
      %348 = vmatpush1.msra.mxu0 0.0
      %349 = vmatprep.subr.mxu0 0.0
      %350 = vmatpush1.msra.mxu0 0.0
      %351 = vmatprep.subr.mxu0 0.0
      %352 = vmatpush1.msra.mxu0 0.0
      %353 = vmatprep.subr.mxu0 0.0
      %354 = vmatpush1.msra.mxu0 0.0
      %355 = vmatprep.subr.mxu0 0.0
      %356 = vmatpush1.msra.mxu0 0.0
      %357 = vmatprep.subr.mxu0 0.0
      %358 = vmatpush1.msra.mxu0 0.0
      %359 = vmatprep.subr.mxu0 0.0
      %360 = vmatpush1.msra.mxu0 0.0
      %361 = vmatprep.subr.mxu0 0.0
      %362 = vmatpush1.msra.mxu0 0.0
      %363 = vmatprep.subr.mxu0 0.0
      %364 = vmatpush1.msra.mxu0 0.0
      %365 = vmatprep.subr.mxu0 0.0
      %366 = vmatpush1.msra.mxu0 0.0
      %367 = vmatprep.subr.mxu0 0.0
      %368 = vmatpush1.msra.mxu0 0.0
      %369 = vmatprep.subr.mxu0 0.0
      %370 = vmatpush1.msra.mxu0 0.0
      %371 = vmatprep.subr.mxu0 0.0
      %372 = vmatpush1.msra.mxu0 0.0
      %373 = vmatprep.subr.mxu0 0.0
      %374 = vmatpush1.msra.mxu0 0.0
      %375 = vmatprep.subr.mxu0 0.0
      %376 = vmatpush1.msra.mxu0 0.0
      %377 = vmatprep.subr.mxu0 0.0
      %378 = vmatpush1.msra.mxu0 0.0
      %379 = vmatprep.subr.mxu0 0.0
      %380 = vmatpush1.msra.mxu0 0.0
      %381 = vmatprep.subr.mxu0 0.0
      %382 = vmatpush1.msra.mxu0 0.0
      %383 = vmatprep.subr.mxu0 0.0
      %384 = vmatpush1.msra.mxu0 0.0
      %385 = vmatprep.subr.mxu0 0.0
      %386 = vmatpush1.msra.mxu0 0.0
      %387 = vmatprep.subr.mxu0 0.0
      %388 = vmatpush1.msra.mxu0 0.0
      %389 = vmatprep.subr.mxu0 0.0
      %390 = vmatpush1.msra.mxu0 0.0
      %391 = vmatprep.subr.mxu0 0.0
      %392 = vmatpush1.msra.mxu0 0.0
      %393 = vmatprep.mubr.f32.mxu0 0.0
      %394 = vmatmul.mubr.f32.gmra.mrb[0].mxu0 %v238
      %v395 = vpop.f32.mrb[0].mxu0
      %v396 = vadd.f32 0.0, %v395
      %v397 = vpop.f32.mrb[0].mxu0
      %v398 = vadd.f32 0.0, %v397
      %399 = vmatprep.mubr.f32.mxu0 0.0
      %400 = vmatmul.mubr.f32.gmra.mrb[0].mxu0 %v241
      %v401 = vpop.f32.mrb[0].mxu0
      %v402 = vadd.f32 0.0, %v401
      %v403 = vpop.f32.mrb[0].mxu0
      %v404 = vadd.f32 0.0, %v403
      %405 = vdwg.mxu0
      %v407 = vsel %vm236, %v211, 0
      %v410 = vsel %vm236, %v212, 0
      %v412 = vsel %vm243, %v208, 0
      %v414 = vsel %vm243, %v219, 0
      %v416 = vsel %vm243, %v209, 0
      %v418 = vsel %vm243, %v220, 0
      %420 = vmatprep.subr.mxu0 %v414
      %421 = vmatpush1.msra.mxu0 %v412
      %422 = vmatprep.subr.mxu0 0.0
      %423 = vmatpush1.msra.mxu0 0.0
      %424 = vmatprep.subr.mxu0 0.0
      %425 = vmatpush1.msra.mxu0 0.0
      %426 = vmatprep.subr.mxu0 0.0
      %427 = vmatpush1.msra.mxu0 0.0
      %428 = vmatprep.subr.mxu0 0.0
      %429 = vmatpush1.msra.mxu0 0.0
      %430 = vmatprep.subr.mxu0 0.0
      %431 = vmatpush1.msra.mxu0 0.0
      %432 = vmatprep.subr.mxu0 0.0
      %433 = vmatpush1.msra.mxu0 0.0
      %434 = vmatprep.subr.mxu0 0.0
      %435 = vmatpush1.msra.mxu0 0.0
      %436 = vmatprep.subr.mxu0 0.0
      %437 = vmatpush1.msra.mxu0 0.0
      %438 = vmatprep.subr.mxu0 0.0
      %439 = vmatpush1.msra.mxu0 0.0
      %440 = vmatprep.subr.mxu0 0.0
      %441 = vmatpush1.msra.mxu0 0.0
      %442 = vmatprep.subr.mxu0 0.0
      %443 = vmatpush1.msra.mxu0 0.0
      %444 = vmatprep.subr.mxu0 0.0
      %445 = vmatpush1.msra.mxu0 0.0
      %446 = vmatprep.subr.mxu0 0.0
      %447 = vmatpush1.msra.mxu0 0.0
      %448 = vmatprep.subr.mxu0 0.0
      %449 = vmatpush1.msra.mxu0 0.0
      %450 = vmatprep.subr.mxu0 0.0
      %451 = vmatpush1.msra.mxu0 0.0
      %452 = vmatprep.subr.mxu0 0.0
      %453 = vmatpush1.msra.mxu0 0.0
      %454 = vmatprep.subr.mxu0 0.0
      %455 = vmatpush1.msra.mxu0 0.0
      %456 = vmatprep.subr.mxu0 0.0
      %457 = vmatpush1.msra.mxu0 0.0
      %458 = vmatprep.subr.mxu0 0.0
      %459 = vmatpush1.msra.mxu0 0.0
      %460 = vmatprep.subr.mxu0 0.0
      %461 = vmatpush1.msra.mxu0 0.0
      %462 = vmatprep.subr.mxu0 0.0
      %463 = vmatpush1.msra.mxu0 0.0
      %464 = vmatprep.subr.mxu0 0.0
      %465 = vmatpush1.msra.mxu0 0.0
      %466 = vmatprep.subr.mxu0 0.0
      %467 = vmatpush1.msra.mxu0 0.0
      %468 = vmatprep.subr.mxu0 0.0
      %469 = vmatpush1.msra.mxu0 0.0
      %470 = vmatprep.subr.mxu0 0.0
      %471 = vmatpush1.msra.mxu0 0.0
      %472 = vmatprep.subr.mxu0 0.0
      %473 = vmatpush1.msra.mxu0 0.0
      %474 = vmatprep.subr.mxu0 0.0
      %475 = vmatpush1.msra.mxu0 0.0
      %476 = vmatprep.subr.mxu0 0.0
      %477 = vmatpush1.msra.mxu0 0.0
      %478 = vmatprep.subr.mxu0 0.0
      %479 = vmatpush1.msra.mxu0 0.0
      %480 = vmatprep.subr.mxu0 0.0
      %481 = vmatpush1.msra.mxu0 0.0
      %482 = vmatprep.subr.mxu0 0.0
      %483 = vmatpush1.msra.mxu0 0.0
      %484 = vmatprep.mubr.f32.mxu0 0.0
      %485 = vmatmul.mubr.f32.gmra.mrb[0].mxu0 %v407
      %v486 = vpop.f32.mrb[0].mxu0
      %v487 = vadd.f32 %v319, %v486
      %v488 = vpop.f32.mrb[0].mxu0
      %v489 = vadd.f32 %v321, %v488
      %490 = vmatprep.mubr.f32.mxu0 0.0
      %491 = vmatmul.mubr.f32.gmra.mrb[0].mxu0 %v410
      %v492 = vpop.f32.mrb[0].mxu0
      %v493 = vadd.f32 %v325, %v492
      %v494 = vpop.f32.mrb[0].mxu0
      %v495 = vadd.f32 %v327, %v494
      %496 = vdwg.mxu0
      %497 = vmatprep.subr.mxu0 %v418
      %498 = vmatpush1.msra.mxu0 %v416
      %499 = vmatprep.subr.mxu0 0.0
      %500 = vmatpush1.msra.mxu0 0.0
      %501 = vmatprep.subr.mxu0 0.0
      %502 = vmatpush1.msra.mxu0 0.0
      %503 = vmatprep.subr.mxu0 0.0
      %504 = vmatpush1.msra.mxu0 0.0
      %505 = vmatprep.subr.mxu0 0.0
      %506 = vmatpush1.msra.mxu0 0.0
      %507 = vmatprep.subr.mxu0 0.0
      %508 = vmatpush1.msra.mxu0 0.0
      %509 = vmatprep.subr.mxu0 0.0
      %510 = vmatpush1.msra.mxu0 0.0
      %511 = vmatprep.subr.mxu0 0.0
      %512 = vmatpush1.msra.mxu0 0.0
      %513 = vmatprep.subr.mxu0 0.0
      %514 = vmatpush1.msra.mxu0 0.0
      %515 = vmatprep.subr.mxu0 0.0
      %516 = vmatpush1.msra.mxu0 0.0
      %517 = vmatprep.subr.mxu0 0.0
      %518 = vmatpush1.msra.mxu0 0.0
      %519 = vmatprep.subr.mxu0 0.0
      %520 = vmatpush1.msra.mxu0 0.0
      %521 = vmatprep.subr.mxu0 0.0
      %522 = vmatpush1.msra.mxu0 0.0
      %523 = vmatprep.subr.mxu0 0.0
      %524 = vmatpush1.msra.mxu0 0.0
      %525 = vmatprep.subr.mxu0 0.0
      %526 = vmatpush1.msra.mxu0 0.0
      %527 = vmatprep.subr.mxu0 0.0
      %528 = vmatpush1.msra.mxu0 0.0
      %529 = vmatprep.subr.mxu0 0.0
      %530 = vmatpush1.msra.mxu0 0.0
      %531 = vmatprep.subr.mxu0 0.0
      %532 = vmatpush1.msra.mxu0 0.0
      %533 = vmatprep.subr.mxu0 0.0
      %534 = vmatpush1.msra.mxu0 0.0
      %535 = vmatprep.subr.mxu0 0.0
      %536 = vmatpush1.msra.mxu0 0.0
      %537 = vmatprep.subr.mxu0 0.0
      %538 = vmatpush1.msra.mxu0 0.0
      %539 = vmatprep.subr.mxu0 0.0
      %540 = vmatpush1.msra.mxu0 0.0
      %541 = vmatprep.subr.mxu0 0.0
      %542 = vmatpush1.msra.mxu0 0.0
      %543 = vmatprep.subr.mxu0 0.0
      %544 = vmatpush1.msra.mxu0 0.0
      %545 = vmatprep.subr.mxu0 0.0
      %546 = vmatpush1.msra.mxu0 0.0
      %547 = vmatprep.subr.mxu0 0.0
      %548 = vmatpush1.msra.mxu0 0.0
      %549 = vmatprep.subr.mxu0 0.0
      %550 = vmatpush1.msra.mxu0 0.0
      %551 = vmatprep.subr.mxu0 0.0
      %552 = vmatpush1.msra.mxu0 0.0
      %553 = vmatprep.subr.mxu0 0.0
      %554 = vmatpush1.msra.mxu0 0.0
      %555 = vmatprep.subr.mxu0 0.0
      %556 = vmatpush1.msra.mxu0 0.0
      %557 = vmatprep.subr.mxu0 0.0
      %558 = vmatpush1.msra.mxu0 0.0
      %559 = vmatprep.subr.mxu0 0.0
      %560 = vmatpush1.msra.mxu0 0.0
      %561 = vmatprep.mubr.f32.mxu0 0.0
      %562 = vmatmul.mubr.f32.gmra.mrb[0].mxu0 %v407
      %v563 = vpop.f32.mrb[0].mxu0
      %v564 = vadd.f32 %v396, %v563
      %v565 = vpop.f32.mrb[0].mxu0
      %v566 = vadd.f32 %v398, %v565
      %567 = vmatprep.mubr.f32.mxu0 0.0
      %568 = vmatmul.mubr.f32.gmra.mrb[0].mxu0 %v410
      %v569 = vpop.f32.mrb[0].mxu0
      %v570 = vadd.f32 %v402, %v569
      %v571 = vpop.f32.mrb[0].mxu0
      %v572 = vadd.f32 %v404, %v571
      %573 = vdwg.mxu0
      %s574 = scalar_lea.vmem %s0, 32
      %v575 = vld [vmem:[%s574] sm:$0xff]
      %v576 = vld [vmem:[%s574 + $0x8] sm:$0xff]
      %577 = vrot.lane.b32.xlu0 %v208, 126
      %v578 = vpop.permute.xlu0 %577
      %579 = vrot.lane.b32.xlu0 %v219, 126
      %v580 = vpop.permute.xlu0 %579
      %581 = vrot.lane.b32.xlu0 %v209, 126
      %v582 = vpop.permute.xlu0 %581
      %583 = vrot.lane.b32.xlu0 %v220, 126
      %v584 = vpop.permute.xlu0 %583
      %585 = vrot.lane.b32.xlu0 %v210, 126
      %v586 = vpop.permute.xlu0 %585
      %vm587 = vcmask 1031168
      %v588 = vsel %vm587, %v578, %v580
      %v589 = vsel %vm587, %v580, %v582
      %v590 = vsel %vm587, %v582, %v584
      %v591 = vsel %vm587, %v584, %v586
      %v593 = vsel %vm236, %v575, 0
      %v596 = vsel %vm236, %v576, 0
      %v598 = vsel %vm243, %v588, 0
      %v600 = vsel %vm243, %v589, 0
      %v602 = vsel %vm243, %v590, 0
      %v604 = vsel %vm243, %v591, 0
      %606 = vmatprep.subr.mxu0 %v600
      %607 = vmatpush1.msra.mxu0 %v598
      %608 = vmatprep.subr.mxu0 0.0
      %609 = vmatpush1.msra.mxu0 0.0
      %610 = vmatprep.subr.mxu0 0.0
      %611 = vmatpush1.msra.mxu0 0.0
      %612 = vmatprep.subr.mxu0 0.0
      %613 = vmatpush1.msra.mxu0 0.0
      %614 = vmatprep.subr.mxu0 0.0
      %615 = vmatpush1.msra.mxu0 0.0
      %616 = vmatprep.subr.mxu0 0.0
      %617 = vmatpush1.msra.mxu0 0.0
      %618 = vmatprep.subr.mxu0 0.0
      %619 = vmatpush1.msra.mxu0 0.0
      %620 = vmatprep.subr.mxu0 0.0
      %621 = vmatpush1.msra.mxu0 0.0
      %622 = vmatprep.subr.mxu0 0.0
      %623 = vmatpush1.msra.mxu0 0.0
      %624 = vmatprep.subr.mxu0 0.0
      %625 = vmatpush1.msra.mxu0 0.0
      %626 = vmatprep.subr.mxu0 0.0
      %627 = vmatpush1.msra.mxu0 0.0
      %628 = vmatprep.subr.mxu0 0.0
      %629 = vmatpush1.msra.mxu0 0.0
      %630 = vmatprep.subr.mxu0 0.0
      %631 = vmatpush1.msra.mxu0 0.0
      %632 = vmatprep.subr.mxu0 0.0
      %633 = vmatpush1.msra.mxu0 0.0
      %634 = vmatprep.subr.mxu0 0.0
      %635 = vmatpush1.msra.mxu0 0.0
      %636 = vmatprep.subr.mxu0 0.0
      %637 = vmatpush1.msra.mxu0 0.0
      %638 = vmatprep.subr.mxu0 0.0
      %639 = vmatpush1.msra.mxu0 0.0
      %640 = vmatprep.subr.mxu0 0.0
      %641 = vmatpush1.msra.mxu0 0.0
      %642 = vmatprep.subr.mxu0 0.0
      %643 = vmatpush1.msra.mxu0 0.0
      %644 = vmatprep.subr.mxu0 0.0
      %645 = vmatpush1.msra.mxu0 0.0
      %646 = vmatprep.subr.mxu0 0.0
      %647 = vmatpush1.msra.mxu0 0.0
      %648 = vmatprep.subr.mxu0 0.0
      %649 = vmatpush1.msra.mxu0 0.0
      %650 = vmatprep.subr.mxu0 0.0
      %651 = vmatpush1.msra.mxu0 0.0
      %652 = vmatprep.subr.mxu0 0.0
      %653 = vmatpush1.msra.mxu0 0.0
      %654 = vmatprep.subr.mxu0 0.0
      %655 = vmatpush1.msra.mxu0 0.0
      %656 = vmatprep.subr.mxu0 0.0
      %657 = vmatpush1.msra.mxu0 0.0
      %658 = vmatprep.subr.mxu0 0.0
      %659 = vmatpush1.msra.mxu0 0.0
      %660 = vmatprep.subr.mxu0 0.0
      %661 = vmatpush1.msra.mxu0 0.0
      %662 = vmatprep.subr.mxu0 0.0
      %663 = vmatpush1.msra.mxu0 0.0
      %664 = vmatprep.subr.mxu0 0.0
      %665 = vmatpush1.msra.mxu0 0.0
      %666 = vmatprep.subr.mxu0 0.0
      %667 = vmatpush1.msra.mxu0 0.0
      %668 = vmatprep.subr.mxu0 0.0
      %669 = vmatpush1.msra.mxu0 0.0
      %670 = vmatprep.mubr.f32.mxu0 0.0
      %671 = vmatmul.mubr.f32.gmra.mrb[0].mxu0 %v593
      %v672 = vpop.f32.mrb[0].mxu0
      %v673 = vadd.f32 0.0, %v672
      %v674 = vpop.f32.mrb[0].mxu0
      %v675 = vadd.f32 0.0, %v674
      %676 = vmatprep.mubr.f32.mxu0 0.0
      %677 = vmatmul.mubr.f32.gmra.mrb[0].mxu0 %v596
      %v678 = vpop.f32.mrb[0].mxu0
      %v679 = vadd.f32 0.0, %v678
      %v680 = vpop.f32.mrb[0].mxu0
      %v681 = vadd.f32 0.0, %v680
      %682 = vdwg.mxu0
      %683 = vmatprep.subr.mxu0 %v604
      %684 = vmatpush1.msra.mxu0 %v602
      %685 = vmatprep.subr.mxu0 0.0
      %686 = vmatpush1.msra.mxu0 0.0
      %687 = vmatprep.subr.mxu0 0.0
      %688 = vmatpush1.msra.mxu0 0.0
      %689 = vmatprep.subr.mxu0 0.0
      %690 = vmatpush1.msra.mxu0 0.0
      %691 = vmatprep.subr.mxu0 0.0
      %692 = vmatpush1.msra.mxu0 0.0
      %693 = vmatprep.subr.mxu0 0.0
      %694 = vmatpush1.msra.mxu0 0.0
      %695 = vmatprep.subr.mxu0 0.0
      %696 = vmatpush1.msra.mxu0 0.0
      %697 = vmatprep.subr.mxu0 0.0
      %698 = vmatpush1.msra.mxu0 0.0
      %699 = vmatprep.subr.mxu0 0.0
      %700 = vmatpush1.msra.mxu0 0.0
      %701 = vmatprep.subr.mxu0 0.0
      %702 = vmatpush1.msra.mxu0 0.0
      %703 = vmatprep.subr.mxu0 0.0
      %704 = vmatpush1.msra.mxu0 0.0
      %705 = vmatprep.subr.mxu0 0.0
      %706 = vmatpush1.msra.mxu0 0.0
      %707 = vmatprep.subr.mxu0 0.0
      %708 = vmatpush1.msra.mxu0 0.0
      %709 = vmatprep.subr.mxu0 0.0
      %710 = vmatpush1.msra.mxu0 0.0
      %711 = vmatprep.subr.mxu0 0.0
      %712 = vmatpush1.msra.mxu0 0.0
      %713 = vmatprep.subr.mxu0 0.0
      %714 = vmatpush1.msra.mxu0 0.0
      %715 = vmatprep.subr.mxu0 0.0
      %716 = vmatpush1.msra.mxu0 0.0
      %717 = vmatprep.subr.mxu0 0.0
      %718 = vmatpush1.msra.mxu0 0.0
      %719 = vmatprep.subr.mxu0 0.0
      %720 = vmatpush1.msra.mxu0 0.0
      %721 = vmatprep.subr.mxu0 0.0
      %722 = vmatpush1.msra.mxu0 0.0
      %723 = vmatprep.subr.mxu0 0.0
      %724 = vmatpush1.msra.mxu0 0.0
      %725 = vmatprep.subr.mxu0 0.0
      %726 = vmatpush1.msra.mxu0 0.0
      %727 = vmatprep.subr.mxu0 0.0
      %728 = vmatpush1.msra.mxu0 0.0
      %729 = vmatprep.subr.mxu0 0.0
      %730 = vmatpush1.msra.mxu0 0.0
      %731 = vmatprep.subr.mxu0 0.0
      %732 = vmatpush1.msra.mxu0 0.0
      %733 = vmatprep.subr.mxu0 0.0
      %734 = vmatpush1.msra.mxu0 0.0
      %735 = vmatprep.subr.mxu0 0.0
      %736 = vmatpush1.msra.mxu0 0.0
      %737 = vmatprep.subr.mxu0 0.0
      %738 = vmatpush1.msra.mxu0 0.0
      %739 = vmatprep.subr.mxu0 0.0
      %740 = vmatpush1.msra.mxu0 0.0
      %741 = vmatprep.subr.mxu0 0.0
      %742 = vmatpush1.msra.mxu0 0.0
      %743 = vmatprep.subr.mxu0 0.0
      %744 = vmatpush1.msra.mxu0 0.0
      %745 = vmatprep.subr.mxu0 0.0
      %746 = vmatpush1.msra.mxu0 0.0
      %747 = vmatprep.mubr.f32.mxu0 0.0
      %748 = vmatmul.mubr.f32.gmra.mrb[0].mxu0 %v593
      %v749 = vpop.f32.mrb[0].mxu0
      %v750 = vadd.f32 0.0, %v749
      %v751 = vpop.f32.mrb[0].mxu0
      %v752 = vadd.f32 0.0, %v751
      %753 = vmatprep.mubr.f32.mxu0 0.0
      %754 = vmatmul.mubr.f32.gmra.mrb[0].mxu0 %v596
      %v755 = vpop.f32.mrb[0].mxu0
      %v756 = vadd.f32 0.0, %v755
      %v757 = vpop.f32.mrb[0].mxu0
      %v758 = vadd.f32 0.0, %v757
      %759 = vdwg.mxu0
      %v760 = vadd.f32 %v487, %v673
      %v761 = vadd.f32 %v489, %v675
      %v762 = vadd.f32 %v564, %v750
      %v763 = vadd.f32 %v566, %v752
      %v764 = vadd.f32 %v493, %v679
      %v765 = vadd.f32 %v495, %v681
      %v766 = vadd.f32 %v570, %v756
      %v767 = vadd.f32 %v572, %v758
      %s768 = scalar_lea.vmem %s0, 48
      %v769 = vld [vmem:[%s768] sm:$0xff]
      %v770 = vld [vmem:[%s768 + $0x8] sm:$0xff]
      %771 = vrot.lane.b32.xlu0 %v208, 96
      %v772 = vpop.permute.xlu0 %771
      %773 = vrot.lane.b32.xlu0 %v219, 96
      %v774 = vpop.permute.xlu0 %773
      %775 = vrot.lane.b32.xlu0 %v209, 96
      %v776 = vpop.permute.xlu0 %775
      %777 = vrot.lane.b32.xlu0 %v220, 96
      %v778 = vpop.permute.xlu0 %777
      %779 = vrot.lane.b32.xlu0 %v210, 96
      %v780 = vpop.permute.xlu0 %779
      %vm781 = vcmask 785408
      %v782 = vsel %vm781, %v772, %v774
      %v783 = vsel %vm781, %v774, %v776
      %v784 = vsel %vm781, %v776, %v778
      %v785 = vsel %vm781, %v778, %v780
      %v787 = vsel %vm236, %v769, 0
      %v790 = vsel %vm236, %v770, 0
      %v792 = vsel %vm243, %v782, 0
      %v794 = vsel %vm243, %v783, 0
      %v796 = vsel %vm243, %v784, 0
      %v798 = vsel %vm243, %v785, 0
      %800 = vmatprep.subr.mxu0 %v794
      %801 = vmatpush1.msra.mxu0 %v792
      %802 = vmatprep.subr.mxu0 0.0
      %803 = vmatpush1.msra.mxu0 0.0
      %804 = vmatprep.subr.mxu0 0.0
      %805 = vmatpush1.msra.mxu0 0.0
      %806 = vmatprep.subr.mxu0 0.0
      %807 = vmatpush1.msra.mxu0 0.0
      %808 = vmatprep.subr.mxu0 0.0
      %809 = vmatpush1.msra.mxu0 0.0
      %810 = vmatprep.subr.mxu0 0.0
      %811 = vmatpush1.msra.mxu0 0.0
      %812 = vmatprep.subr.mxu0 0.0
      %813 = vmatpush1.msra.mxu0 0.0
      %814 = vmatprep.subr.mxu0 0.0
      %815 = vmatpush1.msra.mxu0 0.0
      %816 = vmatprep.subr.mxu0 0.0
      %817 = vmatpush1.msra.mxu0 0.0
      %818 = vmatprep.subr.mxu0 0.0
      %819 = vmatpush1.msra.mxu0 0.0
      %820 = vmatprep.subr.mxu0 0.0
      %821 = vmatpush1.msra.mxu0 0.0
      %822 = vmatprep.subr.mxu0 0.0
      %823 = vmatpush1.msra.mxu0 0.0
      %824 = vmatprep.subr.mxu0 0.0
      %825 = vmatpush1.msra.mxu0 0.0
      %826 = vmatprep.subr.mxu0 0.0
      %827 = vmatpush1.msra.mxu0 0.0
      %828 = vmatprep.subr.mxu0 0.0
      %829 = vmatpush1.msra.mxu0 0.0
      %830 = vmatprep.subr.mxu0 0.0
      %831 = vmatpush1.msra.mxu0 0.0
      %832 = vmatprep.subr.mxu0 0.0
      %833 = vmatpush1.msra.mxu0 0.0
      %834 = vmatprep.subr.mxu0 0.0
      %835 = vmatpush1.msra.mxu0 0.0
      %836 = vmatprep.subr.mxu0 0.0
      %837 = vmatpush1.msra.mxu0 0.0
      %838 = vmatprep.subr.mxu0 0.0
      %839 = vmatpush1.msra.mxu0 0.0
      %840 = vmatprep.subr.mxu0 0.0
      %841 = vmatpush1.msra.mxu0 0.0
      %842 = vmatprep.subr.mxu0 0.0
      %843 = vmatpush1.msra.mxu0 0.0
      %844 = vmatprep.subr.mxu0 0.0
      %845 = vmatpush1.msra.mxu0 0.0
      %846 = vmatprep.subr.mxu0 0.0
      %847 = vmatpush1.msra.mxu0 0.0
      %848 = vmatprep.subr.mxu0 0.0
      %849 = vmatpush1.msra.mxu0 0.0
      %850 = vmatprep.subr.mxu0 0.0
      %851 = vmatpush1.msra.mxu0 0.0
      %852 = vmatprep.subr.mxu0 0.0
      %853 = vmatpush1.msra.mxu0 0.0
      %854 = vmatprep.subr.mxu0 0.0
      %855 = vmatpush1.msra.mxu0 0.0
      %856 = vmatprep.subr.mxu0 0.0
      %857 = vmatpush1.msra.mxu0 0.0
      %858 = vmatprep.subr.mxu0 0.0
      %859 = vmatpush1.msra.mxu0 0.0
      %860 = vmatprep.subr.mxu0 0.0
      %861 = vmatpush1.msra.mxu0 0.0
      %862 = vmatprep.subr.mxu0 0.0
      %863 = vmatpush1.msra.mxu0 0.0
      %864 = vmatprep.mubr.f32.mxu0 0.0
      %865 = vmatmul.mubr.f32.gmra.mrb[0].mxu0 %v787
      %v866 = vpop.f32.mrb[0].mxu0
      %v867 = vadd.f32 0.0, %v866
      %v868 = vpop.f32.mrb[0].mxu0
      %v869 = vadd.f32 0.0, %v868
      %870 = vmatprep.mubr.f32.mxu0 0.0
      %871 = vmatmul.mubr.f32.gmra.mrb[0].mxu0 %v790
      %v872 = vpop.f32.mrb[0].mxu0
      %v873 = vadd.f32 0.0, %v872
      %v874 = vpop.f32.mrb[0].mxu0
      %v875 = vadd.f32 0.0, %v874
      %876 = vdwg.mxu0
      %877 = vmatprep.subr.mxu0 %v798
      %878 = vmatpush1.msra.mxu0 %v796
      %879 = vmatprep.subr.mxu0 0.0
      %880 = vmatpush1.msra.mxu0 0.0
      %881 = vmatprep.subr.mxu0 0.0
      %882 = vmatpush1.msra.mxu0 0.0
      %883 = vmatprep.subr.mxu0 0.0
      %884 = vmatpush1.msra.mxu0 0.0
      %885 = vmatprep.subr.mxu0 0.0
      %886 = vmatpush1.msra.mxu0 0.0
      %887 = vmatprep.subr.mxu0 0.0
      %888 = vmatpush1.msra.mxu0 0.0
      %889 = vmatprep.subr.mxu0 0.0
      %890 = vmatpush1.msra.mxu0 0.0
      %891 = vmatprep.subr.mxu0 0.0
      %892 = vmatpush1.msra.mxu0 0.0
      %893 = vmatprep.subr.mxu0 0.0
      %894 = vmatpush1.msra.mxu0 0.0
      %895 = vmatprep.subr.mxu0 0.0
      %896 = vmatpush1.msra.mxu0 0.0
      %897 = vmatprep.subr.mxu0 0.0
      %898 = vmatpush1.msra.mxu0 0.0
      %899 = vmatprep.subr.mxu0 0.0
      %900 = vmatpush1.msra.mxu0 0.0
      %901 = vmatprep.subr.mxu0 0.0
      %902 = vmatpush1.msra.mxu0 0.0
      %903 = vmatprep.subr.mxu0 0.0
      %904 = vmatpush1.msra.mxu0 0.0
      %905 = vmatprep.subr.mxu0 0.0
      %906 = vmatpush1.msra.mxu0 0.0
      %907 = vmatprep.subr.mxu0 0.0
      %908 = vmatpush1.msra.mxu0 0.0
      %909 = vmatprep.subr.mxu0 0.0
      %910 = vmatpush1.msra.mxu0 0.0
      %911 = vmatprep.subr.mxu0 0.0
      %912 = vmatpush1.msra.mxu0 0.0
      %913 = vmatprep.subr.mxu0 0.0
      %914 = vmatpush1.msra.mxu0 0.0
      %915 = vmatprep.subr.mxu0 0.0
      %916 = vmatpush1.msra.mxu0 0.0
      %917 = vmatprep.subr.mxu0 0.0
      %918 = vmatpush1.msra.mxu0 0.0
      %919 = vmatprep.subr.mxu0 0.0
      %920 = vmatpush1.msra.mxu0 0.0
      %921 = vmatprep.subr.mxu0 0.0
      %922 = vmatpush1.msra.mxu0 0.0
      %923 = vmatprep.subr.mxu0 0.0
      %924 = vmatpush1.msra.mxu0 0.0
      %925 = vmatprep.subr.mxu0 0.0
      %926 = vmatpush1.msra.mxu0 0.0
      %927 = vmatprep.subr.mxu0 0.0
      %928 = vmatpush1.msra.mxu0 0.0
      %929 = vmatprep.subr.mxu0 0.0
      %930 = vmatpush1.msra.mxu0 0.0
      %931 = vmatprep.subr.mxu0 0.0
      %932 = vmatpush1.msra.mxu0 0.0
      %933 = vmatprep.subr.mxu0 0.0
      %934 = vmatpush1.msra.mxu0 0.0
      %935 = vmatprep.subr.mxu0 0.0
      %936 = vmatpush1.msra.mxu0 0.0
      %937 = vmatprep.subr.mxu0 0.0
      %938 = vmatpush1.msra.mxu0 0.0
      %939 = vmatprep.subr.mxu0 0.0
      %940 = vmatpush1.msra.mxu0 0.0
      %941 = vmatprep.mubr.f32.mxu0 0.0
      %942 = vmatmul.mubr.f32.gmra.mrb[0].mxu0 %v787
      %v943 = vpop.f32.mrb[0].mxu0
      %v944 = vadd.f32 0.0, %v943
      %v945 = vpop.f32.mrb[0].mxu0
      %v946 = vadd.f32 0.0, %v945
      %947 = vmatprep.mubr.f32.mxu0 0.0
      %948 = vmatmul.mubr.f32.gmra.mrb[0].mxu0 %v790
      %v949 = vpop.f32.mrb[0].mxu0
      %v950 = vadd.f32 0.0, %v949
      %v951 = vpop.f32.mrb[0].mxu0
      %v952 = vadd.f32 0.0, %v951
      %953 = vdwg.mxu0
      %v954 = vadd.f32 %v760, %v867
      %v955 = vadd.f32 %v761, %v869
      %v956 = vadd.f32 %v762, %v944
      %v957 = vadd.f32 %v763, %v946
      %v958 = vadd.f32 %v764, %v873
      %v959 = vadd.f32 %v765, %v875
      %v960 = vadd.f32 %v766, %v950
      %v961 = vadd.f32 %v767, %v952
      %s962 = scalar_lea.vmem %s0, 64
      %v963 = vld [vmem:[%s962] sm:$0xff]
      %v964 = vld [vmem:[%s962 + $0x8] sm:$0xff]
      %965 = vrot.lane.b32.xlu0 %v208, 95
      %v966 = vpop.permute.xlu0 %965
      %967 = vrot.lane.b32.xlu0 %v219, 95
      %v968 = vpop.permute.xlu0 %967
      %969 = vrot.lane.b32.xlu0 %v209, 95
      %v970 = vpop.permute.xlu0 %969
      %971 = vrot.lane.b32.xlu0 %v220, 95
      %v972 = vpop.permute.xlu0 %971
      %973 = vrot.lane.b32.xlu0 %v210, 95
      %v974 = vpop.permute.xlu0 %973
      %vm975 = vcmask 777216
      %v976 = vsel %vm975, %v966, %v968
      %v977 = vsel %vm975, %v968, %v970
      %v978 = vsel %vm975, %v970, %v972
      %v979 = vsel %vm975, %v972, %v974
      %v981 = vsel %vm236, %v963, 0
      %v984 = vsel %vm236, %v964, 0
      %v986 = vsel %vm243, %v976, 0
      %v988 = vsel %vm243, %v977, 0
      %v990 = vsel %vm243, %v978, 0
      %v992 = vsel %vm243, %v979, 0
      %994 = vmatprep.subr.mxu0 %v988
      %995 = vmatpush1.msra.mxu0 %v986
      %996 = vmatprep.subr.mxu0 0.0
      %997 = vmatpush1.msra.mxu0 0.0
      %998 = vmatprep.subr.mxu0 0.0
      %999 = vmatpush1.msra.mxu0 0.0
      %1000 = vmatprep.subr.mxu0 0.0
      %1001 = vmatpush1.msra.mxu0 0.0
      %1002 = vmatprep.subr.mxu0 0.0
      %1003 = vmatpush1.msra.mxu0 0.0
      %1004 = vmatprep.subr.mxu0 0.0
      %1005 = vmatpush1.msra.mxu0 0.0
      %1006 = vmatprep.subr.mxu0 0.0
      %1007 = vmatpush1.msra.mxu0 0.0
      %1008 = vmatprep.subr.mxu0 0.0
      %1009 = vmatpush1.msra.mxu0 0.0
      %1010 = vmatprep.subr.mxu0 0.0
      %1011 = vmatpush1.msra.mxu0 0.0
      %1012 = vmatprep.subr.mxu0 0.0
      %1013 = vmatpush1.msra.mxu0 0.0
      %1014 = vmatprep.subr.mxu0 0.0
      %1015 = vmatpush1.msra.mxu0 0.0
      %1016 = vmatprep.subr.mxu0 0.0
      %1017 = vmatpush1.msra.mxu0 0.0
      %1018 = vmatprep.subr.mxu0 0.0
      %1019 = vmatpush1.msra.mxu0 0.0
      %1020 = vmatprep.subr.mxu0 0.0
      %1021 = vmatpush1.msra.mxu0 0.0
      %1022 = vmatprep.subr.mxu0 0.0
      %1023 = vmatpush1.msra.mxu0 0.0
      %1024 = vmatprep.subr.mxu0 0.0
      %1025 = vmatpush1.msra.mxu0 0.0
      %1026 = vmatprep.subr.mxu0 0.0
      %1027 = vmatpush1.msra.mxu0 0.0
      %1028 = vmatprep.subr.mxu0 0.0
      %1029 = vmatpush1.msra.mxu0 0.0
      %1030 = vmatprep.subr.mxu0 0.0
      %1031 = vmatpush1.msra.mxu0 0.0
      %1032 = vmatprep.subr.mxu0 0.0
      %1033 = vmatpush1.msra.mxu0 0.0
      %1034 = vmatprep.subr.mxu0 0.0
      %1035 = vmatpush1.msra.mxu0 0.0
      %1036 = vmatprep.subr.mxu0 0.0
      %1037 = vmatpush1.msra.mxu0 0.0
      %1038 = vmatprep.subr.mxu0 0.0
      %1039 = vmatpush1.msra.mxu0 0.0
      %1040 = vmatprep.subr.mxu0 0.0
      %1041 = vmatpush1.msra.mxu0 0.0
      %1042 = vmatprep.subr.mxu0 0.0
      %1043 = vmatpush1.msra.mxu0 0.0
      %1044 = vmatprep.subr.mxu0 0.0
      %1045 = vmatpush1.msra.mxu0 0.0
      %1046 = vmatprep.subr.mxu0 0.0
      %1047 = vmatpush1.msra.mxu0 0.0
      %1048 = vmatprep.subr.mxu0 0.0
      %1049 = vmatpush1.msra.mxu0 0.0
      %1050 = vmatprep.subr.mxu0 0.0
      %1051 = vmatpush1.msra.mxu0 0.0
      %1052 = vmatprep.subr.mxu0 0.0
      %1053 = vmatpush1.msra.mxu0 0.0
      %1054 = vmatprep.subr.mxu0 0.0
      %1055 = vmatpush1.msra.mxu0 0.0
      %1056 = vmatprep.subr.mxu0 0.0
      %1057 = vmatpush1.msra.mxu0 0.0
      %1058 = vmatprep.mubr.f32.mxu0 0.0
      %1059 = vmatmul.mubr.f32.gmra.mrb[0].mxu0 %v981
      %v1060 = vpop.f32.mrb[0].mxu0
      %v1061 = vadd.f32 0.0, %v1060
      %v1062 = vpop.f32.mrb[0].mxu0
      %v1063 = vadd.f32 0.0, %v1062
      %1064 = vmatprep.mubr.f32.mxu0 0.0
      %1065 = vmatmul.mubr.f32.gmra.mrb[0].mxu0 %v984
      %v1066 = vpop.f32.mrb[0].mxu0
      %v1067 = vadd.f32 0.0, %v1066
      %v1068 = vpop.f32.mrb[0].mxu0
      %v1069 = vadd.f32 0.0, %v1068
      %1070 = vdwg.mxu0
      %1071 = vmatprep.subr.mxu0 %v992
      %1072 = vmatpush1.msra.mxu0 %v990
      %1073 = vmatprep.subr.mxu0 0.0
      %1074 = vmatpush1.msra.mxu0 0.0
      %1075 = vmatprep.subr.mxu0 0.0
      %1076 = vmatpush1.msra.mxu0 0.0
      %1077 = vmatprep.subr.mxu0 0.0
      %1078 = vmatpush1.msra.mxu0 0.0
      %1079 = vmatprep.subr.mxu0 0.0
      %1080 = vmatpush1.msra.mxu0 0.0
      %1081 = vmatprep.subr.mxu0 0.0
      %1082 = vmatpush1.msra.mxu0 0.0
      %1083 = vmatprep.subr.mxu0 0.0
      %1084 = vmatpush1.msra.mxu0 0.0
      %1085 = vmatprep.subr.mxu0 0.0
      %1086 = vmatpush1.msra.mxu0 0.0
      %1087 = vmatprep.subr.mxu0 0.0
      %1088 = vmatpush1.msra.mxu0 0.0
      %1089 = vmatprep.subr.mxu0 0.0
      %1090 = vmatpush1.msra.mxu0 0.0
      %1091 = vmatprep.subr.mxu0 0.0
      %1092 = vmatpush1.msra.mxu0 0.0
      %1093 = vmatprep.subr.mxu0 0.0
      %1094 = vmatpush1.msra.mxu0 0.0
      %1095 = vmatprep.subr.mxu0 0.0
      %1096 = vmatpush1.msra.mxu0 0.0
      %1097 = vmatprep.subr.mxu0 0.0
      %1098 = vmatpush1.msra.mxu0 0.0
      %1099 = vmatprep.subr.mxu0 0.0
      %1100 = vmatpush1.msra.mxu0 0.0
      %1101 = vmatprep.subr.mxu0 0.0
      %1102 = vmatpush1.msra.mxu0 0.0
      %1103 = vmatprep.subr.mxu0 0.0
      %1104 = vmatpush1.msra.mxu0 0.0
      %1105 = vmatprep.subr.mxu0 0.0
      %1106 = vmatpush1.msra.mxu0 0.0
      %1107 = vmatprep.subr.mxu0 0.0
      %1108 = vmatpush1.msra.mxu0 0.0
      %1109 = vmatprep.subr.mxu0 0.0
      %1110 = vmatpush1.msra.mxu0 0.0
      %1111 = vmatprep.subr.mxu0 0.0
      %1112 = vmatpush1.msra.mxu0 0.0
      %1113 = vmatprep.subr.mxu0 0.0
      %1114 = vmatpush1.msra.mxu0 0.0
      %1115 = vmatprep.subr.mxu0 0.0
      %1116 = vmatpush1.msra.mxu0 0.0
      %1117 = vmatprep.subr.mxu0 0.0
      %1118 = vmatpush1.msra.mxu0 0.0
      %1119 = vmatprep.subr.mxu0 0.0
      %1120 = vmatpush1.msra.mxu0 0.0
      %1121 = vmatprep.subr.mxu0 0.0
      %1122 = vmatpush1.msra.mxu0 0.0
      %1123 = vmatprep.subr.mxu0 0.0
      %1124 = vmatpush1.msra.mxu0 0.0
      %1125 = vmatprep.subr.mxu0 0.0
      %1126 = vmatpush1.msra.mxu0 0.0
      %1127 = vmatprep.subr.mxu0 0.0
      %1128 = vmatpush1.msra.mxu0 0.0
      %1129 = vmatprep.subr.mxu0 0.0
      %1130 = vmatpush1.msra.mxu0 0.0
      %1131 = vmatprep.subr.mxu0 0.0
      %1132 = vmatpush1.msra.mxu0 0.0
      %1133 = vmatprep.subr.mxu0 0.0
      %1134 = vmatpush1.msra.mxu0 0.0
      %1135 = vmatprep.mubr.f32.mxu0 0.0
      %1136 = vmatmul.mubr.f32.gmra.mrb[0].mxu0 %v981
      %v1137 = vpop.f32.mrb[0].mxu0
      %v1138 = vadd.f32 0.0, %v1137
      %v1139 = vpop.f32.mrb[0].mxu0
      %v1140 = vadd.f32 0.0, %v1139
      %1141 = vmatprep.mubr.f32.mxu0 0.0
      %1142 = vmatmul.mubr.f32.gmra.mrb[0].mxu0 %v984
      %v1143 = vpop.f32.mrb[0].mxu0
      %v1144 = vadd.f32 0.0, %v1143
      %v1145 = vpop.f32.mrb[0].mxu0
      %v1146 = vadd.f32 0.0, %v1145
      %1147 = vdwg.mxu0
      %v1148 = vadd.f32 %v954, %v1061
      %v1149 = vadd.f32 %v955, %v1063
      %v1150 = vadd.f32 %v956, %v1138
      %v1151 = vadd.f32 %v957, %v1140
      %v1152 = vadd.f32 %v958, %v1067
      %v1153 = vadd.f32 %v959, %v1069
      %v1154 = vadd.f32 %v960, %v1144
      %v1155 = vadd.f32 %v961, %v1146
      %s1156 = scalar_lea.vmem %s0, 80
      %v1157 = vld [vmem:[%s1156] sm:$0xff]
      %v1158 = vld [vmem:[%s1156 + $0x8] sm:$0xff]
      %1159 = vrot.lane.b32.xlu0 %v208, 94
      %v1160 = vpop.permute.xlu0 %1159
      %1161 = vrot.lane.b32.xlu0 %v219, 94
      %v1162 = vpop.permute.xlu0 %1161
      %1163 = vrot.lane.b32.xlu0 %v209, 94
      %v1164 = vpop.permute.xlu0 %1163
      %1165 = vrot.lane.b32.xlu0 %v220, 94
      %v1166 = vpop.permute.xlu0 %1165
      %1167 = vrot.lane.b32.xlu0 %v210, 94
      %v1168 = vpop.permute.xlu0 %1167
      %vm1169 = vcmask 769024
      %v1170 = vsel %vm1169, %v1160, %v1162
      %v1171 = vsel %vm1169, %v1162, %v1164
      %v1172 = vsel %vm1169, %v1164, %v1166
      %v1173 = vsel %vm1169, %v1166, %v1168
      %v1175 = vsel %vm236, %v1157, 0
      %v1178 = vsel %vm236, %v1158, 0
      %v1180 = vsel %vm243, %v1170, 0
      %v1182 = vsel %vm243, %v1171, 0
      %v1184 = vsel %vm243, %v1172, 0
      %v1186 = vsel %vm243, %v1173, 0
      %1188 = vmatprep.subr.mxu0 %v1182
      %1189 = vmatpush1.msra.mxu0 %v1180
      %1190 = vmatprep.subr.mxu0 0.0
      %1191 = vmatpush1.msra.mxu0 0.0
      %1192 = vmatprep.subr.mxu0 0.0
      %1193 = vmatpush1.msra.mxu0 0.0
      %1194 = vmatprep.subr.mxu0 0.0
      %1195 = vmatpush1.msra.mxu0 0.0
      %1196 = vmatprep.subr.mxu0 0.0
      %1197 = vmatpush1.msra.mxu0 0.0
      %1198 = vmatprep.subr.mxu0 0.0
      %1199 = vmatpush1.msra.mxu0 0.0
      %1200 = vmatprep.subr.mxu0 0.0
      %1201 = vmatpush1.msra.mxu0 0.0
      %1202 = vmatprep.subr.mxu0 0.0
      %1203 = vmatpush1.msra.mxu0 0.0
      %1204 = vmatprep.subr.mxu0 0.0
      %1205 = vmatpush1.msra.mxu0 0.0
      %1206 = vmatprep.subr.mxu0 0.0
      %1207 = vmatpush1.msra.mxu0 0.0
      %1208 = vmatprep.subr.mxu0 0.0
      %1209 = vmatpush1.msra.mxu0 0.0
      %1210 = vmatprep.subr.mxu0 0.0
      %1211 = vmatpush1.msra.mxu0 0.0
      %1212 = vmatprep.subr.mxu0 0.0
      %1213 = vmatpush1.msra.mxu0 0.0
      %1214 = vmatprep.subr.mxu0 0.0
      %1215 = vmatpush1.msra.mxu0 0.0
      %1216 = vmatprep.subr.mxu0 0.0
      %1217 = vmatpush1.msra.mxu0 0.0
      %1218 = vmatprep.subr.mxu0 0.0
      %1219 = vmatpush1.msra.mxu0 0.0
      %1220 = vmatprep.subr.mxu0 0.0
      %1221 = vmatpush1.msra.mxu0 0.0
      %1222 = vmatprep.subr.mxu0 0.0
      %1223 = vmatpush1.msra.mxu0 0.0
      %1224 = vmatprep.subr.mxu0 0.0
      %1225 = vmatpush1.msra.mxu0 0.0
      %1226 = vmatprep.subr.mxu0 0.0
      %1227 = vmatpush1.msra.mxu0 0.0
      %1228 = vmatprep.subr.mxu0 0.0
      %1229 = vmatpush1.msra.mxu0 0.0
      %1230 = vmatprep.subr.mxu0 0.0
      %1231 = vmatpush1.msra.mxu0 0.0
      %1232 = vmatprep.subr.mxu0 0.0
      %1233 = vmatpush1.msra.mxu0 0.0
      %1234 = vmatprep.subr.mxu0 0.0
      %1235 = vmatpush1.msra.mxu0 0.0
      %1236 = vmatprep.subr.mxu0 0.0
      %1237 = vmatpush1.msra.mxu0 0.0
      %1238 = vmatprep.subr.mxu0 0.0
      %1239 = vmatpush1.msra.mxu0 0.0
      %1240 = vmatprep.subr.mxu0 0.0
      %1241 = vmatpush1.msra.mxu0 0.0
      %1242 = vmatprep.subr.mxu0 0.0
      %1243 = vmatpush1.msra.mxu0 0.0
      %1244 = vmatprep.subr.mxu0 0.0
      %1245 = vmatpush1.msra.mxu0 0.0
      %1246 = vmatprep.subr.mxu0 0.0
      %1247 = vmatpush1.msra.mxu0 0.0
      %1248 = vmatprep.subr.mxu0 0.0
      %1249 = vmatpush1.msra.mxu0 0.0
      %1250 = vmatprep.subr.mxu0 0.0
      %1251 = vmatpush1.msra.mxu0 0.0
      %1252 = vmatprep.mubr.f32.mxu0 0.0
      %1253 = vmatmul.mubr.f32.gmra.mrb[0].mxu0 %v1175
      %v1254 = vpop.f32.mrb[0].mxu0
      %v1255 = vadd.f32 0.0, %v1254
      %v1256 = vpop.f32.mrb[0].mxu0
      %v1257 = vadd.f32 0.0, %v1256
      %1258 = vmatprep.mubr.f32.mxu0 0.0
      %1259 = vmatmul.mubr.f32.gmra.mrb[0].mxu0 %v1178
      %v1260 = vpop.f32.mrb[0].mxu0
      %v1261 = vadd.f32 0.0, %v1260
      %v1262 = vpop.f32.mrb[0].mxu0
      %v1263 = vadd.f32 0.0, %v1262
      %1264 = vdwg.mxu0
      %1265 = vmatprep.subr.mxu0 %v1186
      %1266 = vmatpush1.msra.mxu0 %v1184
      %1267 = vmatprep.subr.mxu0 0.0
      %1268 = vmatpush1.msra.mxu0 0.0
      %1269 = vmatprep.subr.mxu0 0.0
      %1270 = vmatpush1.msra.mxu0 0.0
      %1271 = vmatprep.subr.mxu0 0.0
      %1272 = vmatpush1.msra.mxu0 0.0
      %1273 = vmatprep.subr.mxu0 0.0
      %1274 = vmatpush1.msra.mxu0 0.0
      %1275 = vmatprep.subr.mxu0 0.0
      %1276 = vmatpush1.msra.mxu0 0.0
      %1277 = vmatprep.subr.mxu0 0.0
      %1278 = vmatpush1.msra.mxu0 0.0
      %1279 = vmatprep.subr.mxu0 0.0
      %1280 = vmatpush1.msra.mxu0 0.0
      %1281 = vmatprep.subr.mxu0 0.0
      %1282 = vmatpush1.msra.mxu0 0.0
      %1283 = vmatprep.subr.mxu0 0.0
      %1284 = vmatpush1.msra.mxu0 0.0
      %1285 = vmatprep.subr.mxu0 0.0
      %1286 = vmatpush1.msra.mxu0 0.0
      %1287 = vmatprep.subr.mxu0 0.0
      %1288 = vmatpush1.msra.mxu0 0.0
      %1289 = vmatprep.subr.mxu0 0.0
      %1290 = vmatpush1.msra.mxu0 0.0
      %1291 = vmatprep.subr.mxu0 0.0
      %1292 = vmatpush1.msra.mxu0 0.0
      %1293 = vmatprep.subr.mxu0 0.0
      %1294 = vmatpush1.msra.mxu0 0.0
      %1295 = vmatprep.subr.mxu0 0.0
      %1296 = vmatpush1.msra.mxu0 0.0
      %1297 = vmatprep.subr.mxu0 0.0
      %1298 = vmatpush1.msra.mxu0 0.0
      %1299 = vmatprep.subr.mxu0 0.0
      %1300 = vmatpush1.msra.mxu0 0.0
      %1301 = vmatprep.subr.mxu0 0.0
      %1302 = vmatpush1.msra.mxu0 0.0
      %1303 = vmatprep.subr.mxu0 0.0
      %1304 = vmatpush1.msra.mxu0 0.0
      %1305 = vmatprep.subr.mxu0 0.0
      %1306 = vmatpush1.msra.mxu0 0.0
      %1307 = vmatprep.subr.mxu0 0.0
      %1308 = vmatpush1.msra.mxu0 0.0
      %1309 = vmatprep.subr.mxu0 0.0
      %1310 = vmatpush1.msra.mxu0 0.0
      %1311 = vmatprep.subr.mxu0 0.0
      %1312 = vmatpush1.msra.mxu0 0.0
      %1313 = vmatprep.subr.mxu0 0.0
      %1314 = vmatpush1.msra.mxu0 0.0
      %1315 = vmatprep.subr.mxu0 0.0
      %1316 = vmatpush1.msra.mxu0 0.0
      %1317 = vmatprep.subr.mxu0 0.0
      %1318 = vmatpush1.msra.mxu0 0.0
      %1319 = vmatprep.subr.mxu0 0.0
      %1320 = vmatpush1.msra.mxu0 0.0
      %1321 = vmatprep.subr.mxu0 0.0
      %1322 = vmatpush1.msra.mxu0 0.0
      %1323 = vmatprep.subr.mxu0 0.0
      %1324 = vmatpush1.msra.mxu0 0.0
      %1325 = vmatprep.subr.mxu0 0.0
      %1326 = vmatpush1.msra.mxu0 0.0
      %1327 = vmatprep.subr.mxu0 0.0
      %1328 = vmatpush1.msra.mxu0 0.0
      %1329 = vmatprep.mubr.f32.mxu0 0.0
      %1330 = vmatmul.mubr.f32.gmra.mrb[0].mxu0 %v1175
      %v1331 = vpop.f32.mrb[0].mxu0
      %v1332 = vadd.f32 0.0, %v1331
      %v1333 = vpop.f32.mrb[0].mxu0
      %v1334 = vadd.f32 0.0, %v1333
      %1335 = vmatprep.mubr.f32.mxu0 0.0
      %1336 = vmatmul.mubr.f32.gmra.mrb[0].mxu0 %v1178
      %v1337 = vpop.f32.mrb[0].mxu0
      %v1338 = vadd.f32 0.0, %v1337
      %v1339 = vpop.f32.mrb[0].mxu0
      %v1340 = vadd.f32 0.0, %v1339
      %1341 = vdwg.mxu0
      %v1342 = vadd.f32 %v1148, %v1255
      %v1343 = vadd.f32 %v1149, %v1257
      %v1344 = vadd.f32 %v1150, %v1332
      %v1345 = vadd.f32 %v1151, %v1334
      %v1346 = vadd.f32 %v1152, %v1261
      %v1347 = vadd.f32 %v1153, %v1263
      %v1348 = vadd.f32 %v1154, %v1338
      %v1349 = vadd.f32 %v1155, %v1340
      %s1350 = scalar_lea.vmem %s0, 96
      %v1351 = vld [vmem:[%s1350] sm:$0xff]
      %v1352 = vld [vmem:[%s1350 + $0x8] sm:$0xff]
      %1353 = vrot.lane.b32.xlu0 %v208, 64
      %v1354 = vpop.permute.xlu0 %1353
      %1355 = vrot.lane.b32.xlu0 %v219, 64
      %v1356 = vpop.permute.xlu0 %1355
      %1357 = vrot.lane.b32.xlu0 %v209, 64
      %v1358 = vpop.permute.xlu0 %1357
      %1359 = vrot.lane.b32.xlu0 %v220, 64
      %v1360 = vpop.permute.xlu0 %1359
      %1361 = vrot.lane.b32.xlu0 %v210, 64
      %v1362 = vpop.permute.xlu0 %1361
      %vm1363 = vcmask 523264
      %v1364 = vsel %vm1363, %v1354, %v1356
      %v1365 = vsel %vm1363, %v1356, %v1358
      %v1366 = vsel %vm1363, %v1358, %v1360
      %v1367 = vsel %vm1363, %v1360, %v1362
      %v1369 = vsel %vm236, %v1351, 0
      %v1372 = vsel %vm236, %v1352, 0
      %v1374 = vsel %vm243, %v1364, 0
      %v1376 = vsel %vm243, %v1365, 0
      %v1378 = vsel %vm243, %v1366, 0
      %v1380 = vsel %vm243, %v1367, 0
      %1382 = vmatprep.subr.mxu0 %v1376
      %1383 = vmatpush1.msra.mxu0 %v1374
      %1384 = vmatprep.subr.mxu0 0.0
      %1385 = vmatpush1.msra.mxu0 0.0
      %1386 = vmatprep.subr.mxu0 0.0
      %1387 = vmatpush1.msra.mxu0 0.0
      %1388 = vmatprep.subr.mxu0 0.0
      %1389 = vmatpush1.msra.mxu0 0.0
      %1390 = vmatprep.subr.mxu0 0.0
      %1391 = vmatpush1.msra.mxu0 0.0
      %1392 = vmatprep.subr.mxu0 0.0
      %1393 = vmatpush1.msra.mxu0 0.0
      %1394 = vmatprep.subr.mxu0 0.0
      %1395 = vmatpush1.msra.mxu0 0.0
      %1396 = vmatprep.subr.mxu0 0.0
      %1397 = vmatpush1.msra.mxu0 0.0
      %1398 = vmatprep.subr.mxu0 0.0
      %1399 = vmatpush1.msra.mxu0 0.0
      %1400 = vmatprep.subr.mxu0 0.0
      %1401 = vmatpush1.msra.mxu0 0.0
      %1402 = vmatprep.subr.mxu0 0.0
      %1403 = vmatpush1.msra.mxu0 0.0
      %1404 = vmatprep.subr.mxu0 0.0
      %1405 = vmatpush1.msra.mxu0 0.0
      %1406 = vmatprep.subr.mxu0 0.0
      %1407 = vmatpush1.msra.mxu0 0.0
      %1408 = vmatprep.subr.mxu0 0.0
      %1409 = vmatpush1.msra.mxu0 0.0
      %1410 = vmatprep.subr.mxu0 0.0
      %1411 = vmatpush1.msra.mxu0 0.0
      %1412 = vmatprep.subr.mxu0 0.0
      %1413 = vmatpush1.msra.mxu0 0.0
      %1414 = vmatprep.subr.mxu0 0.0
      %1415 = vmatpush1.msra.mxu0 0.0
      %1416 = vmatprep.subr.mxu0 0.0
      %1417 = vmatpush1.msra.mxu0 0.0
      %1418 = vmatprep.subr.mxu0 0.0
      %1419 = vmatpush1.msra.mxu0 0.0
      %1420 = vmatprep.subr.mxu0 0.0
      %1421 = vmatpush1.msra.mxu0 0.0
      %1422 = vmatprep.subr.mxu0 0.0
      %1423 = vmatpush1.msra.mxu0 0.0
      %1424 = vmatprep.subr.mxu0 0.0
      %1425 = vmatpush1.msra.mxu0 0.0
      %1426 = vmatprep.subr.mxu0 0.0
      %1427 = vmatpush1.msra.mxu0 0.0
      %1428 = vmatprep.subr.mxu0 0.0
      %1429 = vmatpush1.msra.mxu0 0.0
      %1430 = vmatprep.subr.mxu0 0.0
      %1431 = vmatpush1.msra.mxu0 0.0
      %1432 = vmatprep.subr.mxu0 0.0
      %1433 = vmatpush1.msra.mxu0 0.0
      %1434 = vmatprep.subr.mxu0 0.0
      %1435 = vmatpush1.msra.mxu0 0.0
      %1436 = vmatprep.subr.mxu0 0.0
      %1437 = vmatpush1.msra.mxu0 0.0
      %1438 = vmatprep.subr.mxu0 0.0
      %1439 = vmatpush1.msra.mxu0 0.0
      %1440 = vmatprep.subr.mxu0 0.0
      %1441 = vmatpush1.msra.mxu0 0.0
      %1442 = vmatprep.subr.mxu0 0.0
      %1443 = vmatpush1.msra.mxu0 0.0
      %1444 = vmatprep.subr.mxu0 0.0
      %1445 = vmatpush1.msra.mxu0 0.0
      %1446 = vmatprep.mubr.f32.mxu0 0.0
      %1447 = vmatmul.mubr.f32.gmra.mrb[0].mxu0 %v1369
      %v1448 = vpop.f32.mrb[0].mxu0
      %v1449 = vadd.f32 0.0, %v1448
      %v1450 = vpop.f32.mrb[0].mxu0
      %v1451 = vadd.f32 0.0, %v1450
      %1452 = vmatprep.mubr.f32.mxu0 0.0
      %1453 = vmatmul.mubr.f32.gmra.mrb[0].mxu0 %v1372
      %v1454 = vpop.f32.mrb[0].mxu0
      %v1455 = vadd.f32 0.0, %v1454
      %v1456 = vpop.f32.mrb[0].mxu0
      %v1457 = vadd.f32 0.0, %v1456
      %1458 = vdwg.mxu0
      %1459 = vmatprep.subr.mxu0 %v1380
      %1460 = vmatpush1.msra.mxu0 %v1378
      %1461 = vmatprep.subr.mxu0 0.0
      %1462 = vmatpush1.msra.mxu0 0.0
      %1463 = vmatprep.subr.mxu0 0.0
      %1464 = vmatpush1.msra.mxu0 0.0
      %1465 = vmatprep.subr.mxu0 0.0
      %1466 = vmatpush1.msra.mxu0 0.0
      %1467 = vmatprep.subr.mxu0 0.0
      %1468 = vmatpush1.msra.mxu0 0.0
      %1469 = vmatprep.subr.mxu0 0.0
      %1470 = vmatpush1.msra.mxu0 0.0
      %1471 = vmatprep.subr.mxu0 0.0
      %1472 = vmatpush1.msra.mxu0 0.0
      %1473 = vmatprep.subr.mxu0 0.0
      %1474 = vmatpush1.msra.mxu0 0.0
      %1475 = vmatprep.subr.mxu0 0.0
      %1476 = vmatpush1.msra.mxu0 0.0
      %1477 = vmatprep.subr.mxu0 0.0
      %1478 = vmatpush1.msra.mxu0 0.0
      %1479 = vmatprep.subr.mxu0 0.0
      %1480 = vmatpush1.msra.mxu0 0.0
      %1481 = vmatprep.subr.mxu0 0.0
      %1482 = vmatpush1.msra.mxu0 0.0
      %1483 = vmatprep.subr.mxu0 0.0
      %1484 = vmatpush1.msra.mxu0 0.0
      %1485 = vmatprep.subr.mxu0 0.0
      %1486 = vmatpush1.msra.mxu0 0.0
      %1487 = vmatprep.subr.mxu0 0.0
      %1488 = vmatpush1.msra.mxu0 0.0
      %1489 = vmatprep.subr.mxu0 0.0
      %1490 = vmatpush1.msra.mxu0 0.0
      %1491 = vmatprep.subr.mxu0 0.0
      %1492 = vmatpush1.msra.mxu0 0.0
      %1493 = vmatprep.subr.mxu0 0.0
      %1494 = vmatpush1.msra.mxu0 0.0
      %1495 = vmatprep.subr.mxu0 0.0
      %1496 = vmatpush1.msra.mxu0 0.0
      %1497 = vmatprep.subr.mxu0 0.0
      %1498 = vmatpush1.msra.mxu0 0.0
      %1499 = vmatprep.subr.mxu0 0.0
      %1500 = vmatpush1.msra.mxu0 0.0
      %1501 = vmatprep.subr.mxu0 0.0
      %1502 = vmatpush1.msra.mxu0 0.0
      %1503 = vmatprep.subr.mxu0 0.0
      %1504 = vmatpush1.msra.mxu0 0.0
      %1505 = vmatprep.subr.mxu0 0.0
      %1506 = vmatpush1.msra.mxu0 0.0
      %1507 = vmatprep.subr.mxu0 0.0
      %1508 = vmatpush1.msra.mxu0 0.0
      %1509 = vmatprep.subr.mxu0 0.0
      %1510 = vmatpush1.msra.mxu0 0.0
      %1511 = vmatprep.subr.mxu0 0.0
      %1512 = vmatpush1.msra.mxu0 0.0
      %1513 = vmatprep.subr.mxu0 0.0
      %1514 = vmatpush1.msra.mxu0 0.0
      %1515 = vmatprep.subr.mxu0 0.0
      %1516 = vmatpush1.msra.mxu0 0.0
      %1517 = vmatprep.subr.mxu0 0.0
      %1518 = vmatpush1.msra.mxu0 0.0
      %1519 = vmatprep.subr.mxu0 0.0
      %1520 = vmatpush1.msra.mxu0 0.0
      %1521 = vmatprep.subr.mxu0 0.0
      %1522 = vmatpush1.msra.mxu0 0.0
      %1523 = vmatprep.mubr.f32.mxu0 0.0
      %1524 = vmatmul.mubr.f32.gmra.mrb[0].mxu0 %v1369
      %v1525 = vpop.f32.mrb[0].mxu0
      %v1526 = vadd.f32 0.0, %v1525
      %v1527 = vpop.f32.mrb[0].mxu0
      %v1528 = vadd.f32 0.0, %v1527
      %1529 = vmatprep.mubr.f32.mxu0 0.0
      %1530 = vmatmul.mubr.f32.gmra.mrb[0].mxu0 %v1372
      %v1531 = vpop.f32.mrb[0].mxu0
      %v1532 = vadd.f32 0.0, %v1531
      %v1533 = vpop.f32.mrb[0].mxu0
      %v1534 = vadd.f32 0.0, %v1533
      %1535 = vdwg.mxu0
      %v1536 = vadd.f32 %v1342, %v1449
      %v1537 = vadd.f32 %v1343, %v1451
      %v1538 = vadd.f32 %v1344, %v1526
      %v1539 = vadd.f32 %v1345, %v1528
      %v1540 = vadd.f32 %v1346, %v1455
      %v1541 = vadd.f32 %v1347, %v1457
      %v1542 = vadd.f32 %v1348, %v1532
      %v1543 = vadd.f32 %v1349, %v1534
      %s1544 = scalar_lea.vmem %s0, 112
      %v1545 = vld [vmem:[%s1544] sm:$0xff]
      %v1546 = vld [vmem:[%s1544 + $0x8] sm:$0xff]
      %1547 = vrot.lane.b32.xlu0 %v208, 63
      %v1548 = vpop.permute.xlu0 %1547
      %1549 = vrot.lane.b32.xlu0 %v219, 63
      %v1550 = vpop.permute.xlu0 %1549
      %1551 = vrot.lane.b32.xlu0 %v209, 63
      %v1552 = vpop.permute.xlu0 %1551
      %1553 = vrot.lane.b32.xlu0 %v220, 63
      %v1554 = vpop.permute.xlu0 %1553
      %1555 = vrot.lane.b32.xlu0 %v210, 63
      %v1556 = vpop.permute.xlu0 %1555
      %vm1557 = vcmask 515072
      %v1558 = vsel %vm1557, %v1548, %v1550
      %v1559 = vsel %vm1557, %v1550, %v1552
      %v1560 = vsel %vm1557, %v1552, %v1554
      %v1561 = vsel %vm1557, %v1554, %v1556
      %v1563 = vsel %vm236, %v1545, 0
      %v1566 = vsel %vm236, %v1546, 0
      %v1568 = vsel %vm243, %v1558, 0
      %v1570 = vsel %vm243, %v1559, 0
      %v1572 = vsel %vm243, %v1560, 0
      %v1574 = vsel %vm243, %v1561, 0
      %1576 = vmatprep.subr.mxu0 %v1570
      %1577 = vmatpush1.msra.mxu0 %v1568
      %1578 = vmatprep.subr.mxu0 0.0
      %1579 = vmatpush1.msra.mxu0 0.0
      %1580 = vmatprep.subr.mxu0 0.0
      %1581 = vmatpush1.msra.mxu0 0.0
      %1582 = vmatprep.subr.mxu0 0.0
      %1583 = vmatpush1.msra.mxu0 0.0
      %1584 = vmatprep.subr.mxu0 0.0
      %1585 = vmatpush1.msra.mxu0 0.0
      %1586 = vmatprep.subr.mxu0 0.0
      %1587 = vmatpush1.msra.mxu0 0.0
      %1588 = vmatprep.subr.mxu0 0.0
      %1589 = vmatpush1.msra.mxu0 0.0
      %1590 = vmatprep.subr.mxu0 0.0
      %1591 = vmatpush1.msra.mxu0 0.0
      %1592 = vmatprep.subr.mxu0 0.0
      %1593 = vmatpush1.msra.mxu0 0.0
      %1594 = vmatprep.subr.mxu0 0.0
      %1595 = vmatpush1.msra.mxu0 0.0
      %1596 = vmatprep.subr.mxu0 0.0
      %1597 = vmatpush1.msra.mxu0 0.0
      %1598 = vmatprep.subr.mxu0 0.0
      %1599 = vmatpush1.msra.mxu0 0.0
      %1600 = vmatprep.subr.mxu0 0.0
      %1601 = vmatpush1.msra.mxu0 0.0
      %1602 = vmatprep.subr.mxu0 0.0
      %1603 = vmatpush1.msra.mxu0 0.0
      %1604 = vmatprep.subr.mxu0 0.0
      %1605 = vmatpush1.msra.mxu0 0.0
      %1606 = vmatprep.subr.mxu0 0.0
      %1607 = vmatpush1.msra.mxu0 0.0
      %1608 = vmatprep.subr.mxu0 0.0
      %1609 = vmatpush1.msra.mxu0 0.0
      %1610 = vmatprep.subr.mxu0 0.0
      %1611 = vmatpush1.msra.mxu0 0.0
      %1612 = vmatprep.subr.mxu0 0.0
      %1613 = vmatpush1.msra.mxu0 0.0
      %1614 = vmatprep.subr.mxu0 0.0
      %1615 = vmatpush1.msra.mxu0 0.0
      %1616 = vmatprep.subr.mxu0 0.0
      %1617 = vmatpush1.msra.mxu0 0.0
      %1618 = vmatprep.subr.mxu0 0.0
      %1619 = vmatpush1.msra.mxu0 0.0
      %1620 = vmatprep.subr.mxu0 0.0
      %1621 = vmatpush1.msra.mxu0 0.0
      %1622 = vmatprep.subr.mxu0 0.0
      %1623 = vmatpush1.msra.mxu0 0.0
      %1624 = vmatprep.subr.mxu0 0.0
      %1625 = vmatpush1.msra.mxu0 0.0
      %1626 = vmatprep.subr.mxu0 0.0
      %1627 = vmatpush1.msra.mxu0 0.0
      %1628 = vmatprep.subr.mxu0 0.0
      %1629 = vmatpush1.msra.mxu0 0.0
      %1630 = vmatprep.subr.mxu0 0.0
      %1631 = vmatpush1.msra.mxu0 0.0
      %1632 = vmatprep.subr.mxu0 0.0
      %1633 = vmatpush1.msra.mxu0 0.0
      %1634 = vmatprep.subr.mxu0 0.0
      %1635 = vmatpush1.msra.mxu0 0.0
      %1636 = vmatprep.subr.mxu0 0.0
      %1637 = vmatpush1.msra.mxu0 0.0
      %1638 = vmatprep.subr.mxu0 0.0
      %1639 = vmatpush1.msra.mxu0 0.0
      %1640 = vmatprep.mubr.f32.mxu0 0.0
      %1641 = vmatmul.mubr.f32.gmra.mrb[0].mxu0 %v1563
      %v1642 = vpop.f32.mrb[0].mxu0
      %v1643 = vadd.f32 0.0, %v1642
      %v1644 = vpop.f32.mrb[0].mxu0
      %v1645 = vadd.f32 0.0, %v1644
      %1646 = vmatprep.mubr.f32.mxu0 0.0
      %1647 = vmatmul.mubr.f32.gmra.mrb[0].mxu0 %v1566
      %v1648 = vpop.f32.mrb[0].mxu0
      %v1649 = vadd.f32 0.0, %v1648
      %v1650 = vpop.f32.mrb[0].mxu0
      %v1651 = vadd.f32 0.0, %v1650
      %1652 = vdwg.mxu0
      %1653 = vmatprep.subr.mxu0 %v1574
      %1654 = vmatpush1.msra.mxu0 %v1572
      %1655 = vmatprep.subr.mxu0 0.0
      %1656 = vmatpush1.msra.mxu0 0.0
      %1657 = vmatprep.subr.mxu0 0.0
      %1658 = vmatpush1.msra.mxu0 0.0
      %1659 = vmatprep.subr.mxu0 0.0
      %1660 = vmatpush1.msra.mxu0 0.0
      %1661 = vmatprep.subr.mxu0 0.0
      %1662 = vmatpush1.msra.mxu0 0.0
      %1663 = vmatprep.subr.mxu0 0.0
      %1664 = vmatpush1.msra.mxu0 0.0
      %1665 = vmatprep.subr.mxu0 0.0
      %1666 = vmatpush1.msra.mxu0 0.0
      %1667 = vmatprep.subr.mxu0 0.0
      %1668 = vmatpush1.msra.mxu0 0.0
      %1669 = vmatprep.subr.mxu0 0.0
      %1670 = vmatpush1.msra.mxu0 0.0
      %1671 = vmatprep.subr.mxu0 0.0
      %1672 = vmatpush1.msra.mxu0 0.0
      %1673 = vmatprep.subr.mxu0 0.0
      %1674 = vmatpush1.msra.mxu0 0.0
      %1675 = vmatprep.subr.mxu0 0.0
      %1676 = vmatpush1.msra.mxu0 0.0
      %1677 = vmatprep.subr.mxu0 0.0
      %1678 = vmatpush1.msra.mxu0 0.0
      %1679 = vmatprep.subr.mxu0 0.0
      %1680 = vmatpush1.msra.mxu0 0.0
      %1681 = vmatprep.subr.mxu0 0.0
      %1682 = vmatpush1.msra.mxu0 0.0
      %1683 = vmatprep.subr.mxu0 0.0
      %1684 = vmatpush1.msra.mxu0 0.0
      %1685 = vmatprep.subr.mxu0 0.0
      %1686 = vmatpush1.msra.mxu0 0.0
      %1687 = vmatprep.subr.mxu0 0.0
      %1688 = vmatpush1.msra.mxu0 0.0
      %1689 = vmatprep.subr.mxu0 0.0
      %1690 = vmatpush1.msra.mxu0 0.0
      %1691 = vmatprep.subr.mxu0 0.0
      %1692 = vmatpush1.msra.mxu0 0.0
      %1693 = vmatprep.subr.mxu0 0.0
      %1694 = vmatpush1.msra.mxu0 0.0
      %1695 = vmatprep.subr.mxu0 0.0
      %1696 = vmatpush1.msra.mxu0 0.0
      %1697 = vmatprep.subr.mxu0 0.0
      %1698 = vmatpush1.msra.mxu0 0.0
      %1699 = vmatprep.subr.mxu0 0.0
      %1700 = vmatpush1.msra.mxu0 0.0
      %1701 = vmatprep.subr.mxu0 0.0
      %1702 = vmatpush1.msra.mxu0 0.0
      %1703 = vmatprep.subr.mxu0 0.0
      %1704 = vmatpush1.msra.mxu0 0.0
      %1705 = vmatprep.subr.mxu0 0.0
      %1706 = vmatpush1.msra.mxu0 0.0
      %1707 = vmatprep.subr.mxu0 0.0
      %1708 = vmatpush1.msra.mxu0 0.0
      %1709 = vmatprep.subr.mxu0 0.0
      %1710 = vmatpush1.msra.mxu0 0.0
      %1711 = vmatprep.subr.mxu0 0.0
      %1712 = vmatpush1.msra.mxu0 0.0
      %1713 = vmatprep.subr.mxu0 0.0
      %1714 = vmatpush1.msra.mxu0 0.0
      %1715 = vmatprep.subr.mxu0 0.0
      %1716 = vmatpush1.msra.mxu0 0.0
      %1717 = vmatprep.mubr.f32.mxu0 0.0
      %1718 = vmatmul.mubr.f32.gmra.mrb[0].mxu0 %v1563
      %v1719 = vpop.f32.mrb[0].mxu0
      %v1720 = vadd.f32 0.0, %v1719
      %v1721 = vpop.f32.mrb[0].mxu0
      %v1722 = vadd.f32 0.0, %v1721
      %1723 = vmatprep.mubr.f32.mxu0 0.0
      %1724 = vmatmul.mubr.f32.gmra.mrb[0].mxu0 %v1566
      %v1725 = vpop.f32.mrb[0].mxu0
      %v1726 = vadd.f32 0.0, %v1725
      %v1727 = vpop.f32.mrb[0].mxu0
      %v1728 = vadd.f32 0.0, %v1727
      %1729 = vdwg.mxu0
      %v1730 = vadd.f32 %v1536, %v1643
      %v1731 = vadd.f32 %v1537, %v1645
      %v1732 = vadd.f32 %v1538, %v1720
      %v1733 = vadd.f32 %v1539, %v1722
      %v1734 = vadd.f32 %v1540, %v1649
      %v1735 = vadd.f32 %v1541, %v1651
      %v1736 = vadd.f32 %v1542, %v1726
      %v1737 = vadd.f32 %v1543, %v1728
      %s1738 = scalar_lea.vmem %s0, 128
      %v1739 = vld [vmem:[%s1738] sm:$0xff]
      %v1740 = vld [vmem:[%s1738 + $0x8] sm:$0xff]
      %1741 = vrot.lane.b32.xlu0 %v208, 62
      %v1742 = vpop.permute.xlu0 %1741
      %1743 = vrot.lane.b32.xlu0 %v219, 62
      %v1744 = vpop.permute.xlu0 %1743
      %1745 = vrot.lane.b32.xlu0 %v209, 62
      %v1746 = vpop.permute.xlu0 %1745
      %1747 = vrot.lane.b32.xlu0 %v220, 62
      %v1748 = vpop.permute.xlu0 %1747
      %1749 = vrot.lane.b32.xlu0 %v210, 62
      %v1750 = vpop.permute.xlu0 %1749
      %vm1751 = vcmask 506880
      %v1752 = vsel %vm1751, %v1742, %v1744
      %v1753 = vsel %vm1751, %v1744, %v1746
      %v1754 = vsel %vm1751, %v1746, %v1748
      %v1755 = vsel %vm1751, %v1748, %v1750
      %v1757 = vsel %vm236, %v1739, 0
      %v1760 = vsel %vm236, %v1740, 0
      %v1762 = vsel %vm243, %v1752, 0
      %v1764 = vsel %vm243, %v1753, 0
      %v1766 = vsel %vm243, %v1754, 0
      %v1768 = vsel %vm243, %v1755, 0
      %1770 = vmatprep.subr.mxu0 %v1764
      %1771 = vmatpush1.msra.mxu0 %v1762
      %1772 = vmatprep.subr.mxu0 0.0
      %1773 = vmatpush1.msra.mxu0 0.0
      %1774 = vmatprep.subr.mxu0 0.0
      %1775 = vmatpush1.msra.mxu0 0.0
      %1776 = vmatprep.subr.mxu0 0.0
      %1777 = vmatpush1.msra.mxu0 0.0
      %1778 = vmatprep.subr.mxu0 0.0
      %1779 = vmatpush1.msra.mxu0 0.0
      %1780 = vmatprep.subr.mxu0 0.0
      %1781 = vmatpush1.msra.mxu0 0.0
      %1782 = vmatprep.subr.mxu0 0.0
      %1783 = vmatpush1.msra.mxu0 0.0
      %1784 = vmatprep.subr.mxu0 0.0
      %1785 = vmatpush1.msra.mxu0 0.0
      %1786 = vmatprep.subr.mxu0 0.0
      %1787 = vmatpush1.msra.mxu0 0.0
      %1788 = vmatprep.subr.mxu0 0.0
      %1789 = vmatpush1.msra.mxu0 0.0
      %1790 = vmatprep.subr.mxu0 0.0
      %1791 = vmatpush1.msra.mxu0 0.0
      %1792 = vmatprep.subr.mxu0 0.0
      %1793 = vmatpush1.msra.mxu0 0.0
      %1794 = vmatprep.subr.mxu0 0.0
      %1795 = vmatpush1.msra.mxu0 0.0
      %1796 = vmatprep.subr.mxu0 0.0
      %1797 = vmatpush1.msra.mxu0 0.0
      %1798 = vmatprep.subr.mxu0 0.0
      %1799 = vmatpush1.msra.mxu0 0.0
      %1800 = vmatprep.subr.mxu0 0.0
      %1801 = vmatpush1.msra.mxu0 0.0
      %1802 = vmatprep.subr.mxu0 0.0
      %1803 = vmatpush1.msra.mxu0 0.0
      %1804 = vmatprep.subr.mxu0 0.0
      %1805 = vmatpush1.msra.mxu0 0.0
      %1806 = vmatprep.subr.mxu0 0.0
      %1807 = vmatpush1.msra.mxu0 0.0
      %1808 = vmatprep.subr.mxu0 0.0
      %1809 = vmatpush1.msra.mxu0 0.0
      %1810 = vmatprep.subr.mxu0 0.0
      %1811 = vmatpush1.msra.mxu0 0.0
      %1812 = vmatprep.subr.mxu0 0.0
      %1813 = vmatpush1.msra.mxu0 0.0
      %1814 = vmatprep.subr.mxu0 0.0
      %1815 = vmatpush1.msra.mxu0 0.0
      %1816 = vmatprep.subr.mxu0 0.0
      %1817 = vmatpush1.msra.mxu0 0.0
      %1818 = vmatprep.subr.mxu0 0.0
      %1819 = vmatpush1.msra.mxu0 0.0
      %1820 = vmatprep.subr.mxu0 0.0
      %1821 = vmatpush1.msra.mxu0 0.0
      %1822 = vmatprep.subr.mxu0 0.0
      %1823 = vmatpush1.msra.mxu0 0.0
      %1824 = vmatprep.subr.mxu0 0.0
      %1825 = vmatpush1.msra.mxu0 0.0
      %1826 = vmatprep.subr.mxu0 0.0
      %1827 = vmatpush1.msra.mxu0 0.0
      %1828 = vmatprep.subr.mxu0 0.0
      %1829 = vmatpush1.msra.mxu0 0.0
      %1830 = vmatprep.subr.mxu0 0.0
      %1831 = vmatpush1.msra.mxu0 0.0
      %1832 = vmatprep.subr.mxu0 0.0
      %1833 = vmatpush1.msra.mxu0 0.0
      %1834 = vmatprep.mubr.f32.mxu0 0.0
      %1835 = vmatmul.mubr.f32.gmra.mrb[0].mxu0 %v1757
      %v1836 = vpop.f32.mrb[0].mxu0
      %v1837 = vadd.f32 0.0, %v1836
      %v1838 = vpop.f32.mrb[0].mxu0
      %v1839 = vadd.f32 0.0, %v1838
      %1840 = vmatprep.mubr.f32.mxu0 0.0
      %1841 = vmatmul.mubr.f32.gmra.mrb[0].mxu0 %v1760
      %v1842 = vpop.f32.mrb[0].mxu0
      %v1843 = vadd.f32 0.0, %v1842
      %v1844 = vpop.f32.mrb[0].mxu0
      %v1845 = vadd.f32 0.0, %v1844
      %1846 = vdwg.mxu0
      %1847 = vmatprep.subr.mxu0 %v1768
      %1848 = vmatpush1.msra.mxu0 %v1766
      %1849 = vmatprep.subr.mxu0 0.0
      %1850 = vmatpush1.msra.mxu0 0.0
      %1851 = vmatprep.subr.mxu0 0.0
      %1852 = vmatpush1.msra.mxu0 0.0
      %1853 = vmatprep.subr.mxu0 0.0
      %1854 = vmatpush1.msra.mxu0 0.0
      %1855 = vmatprep.subr.mxu0 0.0
      %1856 = vmatpush1.msra.mxu0 0.0
      %1857 = vmatprep.subr.mxu0 0.0
      %1858 = vmatpush1.msra.mxu0 0.0
      %1859 = vmatprep.subr.mxu0 0.0
      %1860 = vmatpush1.msra.mxu0 0.0
      %1861 = vmatprep.subr.mxu0 0.0
      %1862 = vmatpush1.msra.mxu0 0.0
      %1863 = vmatprep.subr.mxu0 0.0
      %1864 = vmatpush1.msra.mxu0 0.0
      %1865 = vmatprep.subr.mxu0 0.0
      %1866 = vmatpush1.msra.mxu0 0.0
      %1867 = vmatprep.subr.mxu0 0.0
      %1868 = vmatpush1.msra.mxu0 0.0
      %1869 = vmatprep.subr.mxu0 0.0
      %1870 = vmatpush1.msra.mxu0 0.0
      %1871 = vmatprep.subr.mxu0 0.0
      %1872 = vmatpush1.msra.mxu0 0.0
      %1873 = vmatprep.subr.mxu0 0.0
      %1874 = vmatpush1.msra.mxu0 0.0
      %1875 = vmatprep.subr.mxu0 0.0
      %1876 = vmatpush1.msra.mxu0 0.0
      %1877 = vmatprep.subr.mxu0 0.0
      %1878 = vmatpush1.msra.mxu0 0.0
      %1879 = vmatprep.subr.mxu0 0.0
      %1880 = vmatpush1.msra.mxu0 0.0
      %1881 = vmatprep.subr.mxu0 0.0
      %1882 = vmatpush1.msra.mxu0 0.0
      %1883 = vmatprep.subr.mxu0 0.0
      %1884 = vmatpush1.msra.mxu0 0.0
      %1885 = vmatprep.subr.mxu0 0.0
      %1886 = vmatpush1.msra.mxu0 0.0
      %1887 = vmatprep.subr.mxu0 0.0
      %1888 = vmatpush1.msra.mxu0 0.0
      %1889 = vmatprep.subr.mxu0 0.0
      %1890 = vmatpush1.msra.mxu0 0.0
      %1891 = vmatprep.subr.mxu0 0.0
      %1892 = vmatpush1.msra.mxu0 0.0
      %1893 = vmatprep.subr.mxu0 0.0
      %1894 = vmatpush1.msra.mxu0 0.0
      %1895 = vmatprep.subr.mxu0 0.0
      %1896 = vmatpush1.msra.mxu0 0.0
      %1897 = vmatprep.subr.mxu0 0.0
      %1898 = vmatpush1.msra.mxu0 0.0
      %1899 = vmatprep.subr.mxu0 0.0
      %1900 = vmatpush1.msra.mxu0 0.0
      %1901 = vmatprep.subr.mxu0 0.0
      %1902 = vmatpush1.msra.mxu0 0.0
      %1903 = vmatprep.subr.mxu0 0.0
      %1904 = vmatpush1.msra.mxu0 0.0
      %1905 = vmatprep.subr.mxu0 0.0
      %1906 = vmatpush1.msra.mxu0 0.0
      %1907 = vmatprep.subr.mxu0 0.0
      %1908 = vmatpush1.msra.mxu0 0.0
      %1909 = vmatprep.subr.mxu0 0.0
      %1910 = vmatpush1.msra.mxu0 0.0
      %1911 = vmatprep.mubr.f32.mxu0 0.0
      %1912 = vmatmul.mubr.f32.gmra.mrb[0].mxu0 %v1757
      %v1913 = vpop.f32.mrb[0].mxu0
      %v1914 = vadd.f32 0.0, %v1913
      %v1915 = vpop.f32.mrb[0].mxu0
      %v1916 = vadd.f32 0.0, %v1915
      %1917 = vmatprep.mubr.f32.mxu0 0.0
      %1918 = vmatmul.mubr.f32.gmra.mrb[0].mxu0 %v1760
      %v1919 = vpop.f32.mrb[0].mxu0
      %v1920 = vadd.f32 0.0, %v1919
      %v1921 = vpop.f32.mrb[0].mxu0
      %v1922 = vadd.f32 0.0, %v1921
      %1923 = vdwg.mxu0
      %v1924 = vadd.f32 %v1730, %v1837
      %v1925 = vadd.f32 %v1731, %v1839
      %v1926 = vadd.f32 %v1732, %v1914
      %v1927 = vadd.f32 %v1733, %v1916
      %v1928 = vadd.f32 %v1734, %v1843
      %v1929 = vadd.f32 %v1735, %v1845
      %v1930 = vadd.f32 %v1736, %v1920
      %v1931 = vadd.f32 %v1737, %v1922
      %v1932 = vld [vmem:[%s1] sm:$0xff]
      %v1933 = vld [vmem:[%s1 + $0x8] sm:$0xff]
      %1935 = vset.pattern.permute.xlu0 0
      %1936 = vperm.xlu0 %1935, %v1932
      %v1937 = vpop.permute.xlu0 %1936
      %1940 = vset.pattern.permute.xlu0 0
      %1941 = vperm.xlu0 %1940, %v1933
      %v1942 = vpop.permute.xlu0 %1941
      %v1944 = vadd.f32 %v1924, %v1937
      %v1945 = vadd.f32 %v1925, %v1937
      %v1946 = vadd.f32 %v1926, %v1937
      %v1947 = vadd.f32 %v1927, %v1937
      %v1948 = vadd.f32 %v1928, %v1942
      %v1949 = vadd.f32 %v1929, %v1942
      %v1950 = vadd.f32 %v1930, %v1942
      %v1951 = vadd.f32 %v1931, %v1942
      %v1952 = vmax.f32 %v1944, 0.0
      %v1953 = vmax.f32 %v1945, 0.0
      %v1954 = vmax.f32 %v1946, 0.0
      %v1955 = vmax.f32 %v1947, 0.0
      %v1956 = vmax.f32 %v1948, 0.0
      %v1957 = vmax.f32 %v1949, 0.0
      %v1958 = vmax.f32 %v1950, 0.0
      %v1959 = vmax.f32 %v1951, 0.0
      %1960 = vst [vmem:[%s206] sm:$0xff] %v1952
      %1961 = vst [vmem:[%s206 + $0x8] sm:$0xff] %v1953
      %1962 = vst [vmem:[%s206 + $0x10] sm:$0xff] %v1954
      %1963 = vst [vmem:[%s206 + $0x18] sm:$0xff] %v1955
      %1964 = vst [vmem:[%s206 + $0x20] sm:$0xff] %v1956
      %1965 = vst [vmem:[%s206 + $0x28] sm:$0xff] %v1957
      %1966 = vst [vmem:[%s206 + $0x30] sm:$0xff] %v1958
      %1967 = vst [vmem:[%s206 + $0x38] sm:$0xff] %v1959
      %s1968 = smul.u32 4, %s19
      %p1969 = scmp.lt.s32.totalorder %s18, 1
      %s1970 = scalar_select %p1969, %s18, 1
      %p1971 = scmp.lt.s32.totalorder %s1968, 3
      %s1972 = scalar_select %p1971, %s1968, 3
      %s1973 = smul.addr %s1970, 8
      %s1974 = sadd.s32 %s1972, %s1973
      %s1975 = smul.addr %s1974, 8
      %s1976 = scalar_lea.vmem %s3, %s1975
      // Predicated region
      $region33: #{subpixel_upsample.1} parent=31 // pred_check
        %p1977 = pneg %p116
      $region34: #{subpixel_upsample.1} parent=31 // pred_check_branch
        %1979 = sbr.rel (%p1977) target = $region36
      $region35: #{subpixel_upsample.1} parent=31 // pred_region
        %s1980 = smul.u32 4, %s19
      $region36: #{subpixel_upsample.1} parent=31 // pred_fallthru
        _
    $region32: #{subpixel_upsample.1} parent=5 // pred_fallthru
      _
    %p1981 = scmp.le.s32.totalorder 2, %s9
    // Predicated region
    $region37: #{subpixel_upsample.1} parent=5 // pred_check
      %p1982 = pneg %p1981
    $region38: #{subpixel_upsample.1} parent=5 // pred_check_branch
      %1984 = sbr.rel (%p1982) target = $region40
    $region39: #{subpixel_upsample.1} parent=5 // pred_region
      %s1985 = ssub.s32 %s9, 2
      // Predicated region
      $region41: #{subpixel_upsample.1} parent=39 // pred_check
        %p1986 = pneg %p122
      $region42: #{subpixel_upsample.1} parent=39 // pred_check_branch
        %1988 = sbr.rel (%p1986) target = $region44
      $region43: #{subpixel_upsample.1} parent=39 // pred_region
        %s1989 = smul.u32 4, %s21
        %p1990 = scmp.lt.s32.totalorder %s20, 1
        %s1991 = scalar_select %p1990, %s20, 1
        %p1992 = scmp.lt.s32.totalorder %s1989, 3
        %s1993 = scalar_select %p1992, %s1989, 3
        %s1994 = smul.addr %s1991, 8
        %s1995 = sadd.s32 %s1993, %s1994
        %s1996 = smul.addr %s1995, 8
        %s1997 = scalar_lea.vmem %s3, %s1996
      $region44: #{subpixel_upsample.1} parent=39 // pred_fallthru
        _
    $region40: #{subpixel_upsample.1} parent=5 // pred_fallthru
      _
  $region6: #{subpixel_upsample.1} parent=0 // loop_footer
    %s13 = sadd.s32 1, %s9
  $region7: #{subpixel_upsample.1} parent=0 // loop_footer_branch
    %8 = sbr.rel target = $region3
  $region8: #{subpixel_upsample.1} parent=0 // loop_exit
    _

</llo_original>
